<compile_context>
chip_gen: v5e
topology: v5e:2x2
jax: 0.10.0
libtpu: 0.0.40
codegen_flags: <defaults>
</compile_context>

<pallas_src>
import functools

import jax
import jax.numpy as jnp
from jax.experimental import pallas as pl
from jax.experimental.pallas import tpu as pltpu

EPS = 1e-5  # GroupNorm default eps


# ----------------------------- in-kernel helpers -----------------------------

def _gn1(y, gamma, beta):
    """GroupNorm(1, C) for one (L, C) sample slab. gamma/beta: (1, C).

    Single-pass statistics: sum and sum-of-squares are independent reductions so
    the XLU can overlap them. var = E[x^2] - mu^2 (clamped) is fine in f32 at
    these magnitudes.
    # TODO(synk): switch to two-pass/Welford stats if shipped with large-mean data.
    """
    n = y.shape[0] * y.shape[1]
    s = jnp.sum(y)
    ss = jnp.sum(y * y)
    mu = s * (1.0 / n)
    var = jnp.maximum(ss * (1.0 / n) - mu * mu, 0.0)
    return (y - mu) * jax.lax.rsqrt(var + EPS) * gamma + beta


def _shift_rows_up(y):
    """result[l] = y[l + 1], zero-padded at the bottom. Pure vreg work."""
    L, C = y.shape
    return jnp.concatenate([y[1:, :], jnp.zeros((1, C), jnp.float32)], axis=0)


def _avg_pool_w2(vals, scr_ref):
    """AvgPool2d((1, 2)) along rows.

    Pair-sum happens in vregs (row shift + VPU add); only the stride-2 row
    compaction goes through a small VMEM scratch (1 store + 1 strided ref load),
    because sublane-strided reads are only expressible on refs."""
    L, C = vals.shape
    s = (vals + _shift_rows_up(vals)) * 0.5     # row 2j holds (v[2j] + v[2j+1]) / 2
    scr_ref[:L, :C] = s
    return scr_ref[pl.ds(0, L // 2, stride=2), pl.ds(0, C)]


def _getp(pk_ref, rec):
    """Slice one parameter out of the packed-parameter VMEM block (static offsets)."""
    r0, nrows, ncols = rec
    return pk_ref[r0:r0 + nrows, :ncols]


# ------------------------------- fused block body -------------------------------

def _res_block(h, pk_ref, scr_ref, meta, dil):
    """One ResidualBlock1D on a channels-last (L, Cin) slab; all intermediates in vregs."""
    off = meta["off"]
    K = meta["K"]
    has_res = meta["has_resample"]
    has_stride = meta["has_stride"]
    L = h.shape[0]

    # ---- identity / resample branch: GN(Cin) -> [avgpool] -> 1x1 conv ----
    if has_res:
        gb = _getp(pk_ref, off["gb_res"])                          # (2, Cin)
        idn = _gn1(h, gb[0:1, :], gb[1:2, :])
        if has_stride:
            idn = _avg_pool_w2(idn, scr_ref)
        identity = jnp.dot(idn, _getp(pk_ref, off["w_res"]),
                           preferred_element_type=jnp.float32)     # (Lout, Cout)
    else:
        identity = h                                               # Cin == Cout, no stride

    # ---- bottleneck 1x1 (no bias) -> GN -> ReLU ----
    w_bot = _getp(pk_ref, off["w_bot"])                            # (Cin, P)
    P = w_bot.shape[1]
    gb = _getp(pk_ref, off["gb_bot"])
    y = jnp.dot(h, w_bot, preferred_element_type=jnp.float32)
    y = jnp.maximum(_gn1(y, gb[0:1, :], gb[1:2, :]), 0.0)

    # ---- receptive (1,K) conv (+bias) -> GN -> ReLU ----
    # Zero-pad once in vregs, take K unit-stride row windows, accumulate K MXU dots
    # (no VMEM operand assembly, no scratch stores on the critical path).
    pad = (K // 2) * dil
    if pad > 0:
        zpad = jnp.zeros((pad, P), jnp.float32)
        yp = jnp.concatenate([zpad, y, zpad], axis=0)              # (L + 2*pad, P)
    else:
        yp = y
    r0, _, ncols = off["w_rec"]
    conv = None
    for t in range(K):
        w_t = pk_ref[r0 + t * P:r0 + (t + 1) * P, :ncols]          # (P, P), tap t
        term = jnp.dot(yp[t * dil:t * dil + L, :], w_t,
                       preferred_element_type=jnp.float32)
        conv = term if conv is None else conv + term
    gbb = _getp(pk_ref, off["gbb_rec"])                            # rows: gamma, beta, bias
    conv = conv + gbb[2:3, :]
    y = jnp.maximum(_gn1(conv, gbb[0:1, :], gbb[1:2, :]), 0.0)     # (L, P)

    # ---- [avgpool] -> expansion 1x1 (no bias) -> GN -> ReLU -> + identity ----
    if has_stride:
        y = _avg_pool_w2(y, scr_ref)                               # (L//2, P)
    gb = _getp(pk_ref, off["gb_exp"])
    z = jnp.dot(y, _getp(pk_ref, off["w_exp"]),
                preferred_element_type=jnp.float32)                # (Lout, Cout)
    z = jnp.maximum(_gn1(z, gb[0:1, :], gb[1:2, :]), 0.0)
    return z + identity


# ------------------------------- whole-stage kernel -------------------------------

def _stage_kernel(x_ref, pk_ref, o_ref, scr_ref, *, metas, dil):
    # NCHW block (squeezed to (Cin, W)) -> channels-last (W, Cin), in vregs.
    h = jnp.transpose(x_ref[...]).astype(jnp.float32)
    for meta in metas:                       # Python-unrolled chain of residual blocks
        h = _res_block(h, pk_ref, scr_ref, meta, dil)
    # back to channels-first so the store is directly in NCHW layout.
    o_ref[...] = jnp.transpose(h).astype(o_ref.dtype)


# ------------------------------- parameter packing -------------------------------

def _pack_stage_params(params_list, cmax):
    """Pack every weight/gamma/beta/bias of the stage into ONE (rows, cmax) f32 array
    (a single DMA / VMEM block) plus static row-offset metadata for in-kernel slicing."""
    entries, metas = [], []
    r = 0

    def add(arr):
        nonlocal r
        a = jnp.asarray(arr, jnp.float32)
        if a.ndim == 1:
            a = a[None, :]
        nrows, ncols = a.shape
        entries.append(jnp.pad(a, ((0, 0), (0, cmax - ncols))))
        rec = (r, nrows, ncols)
        r += nrows
        return rec

    for p in params_list:
        K, Pm, _ = p["w_receptive"].shape
        off = {
            "w_bot": add(p["w_bottleneck"]),
            "gb_bot": add(jnp.stack([p["g_bottleneck"].ravel(), p["b_bottleneck"].ravel()])),
            "w_rec": add(p["w_receptive"].reshape(K * Pm, Pm)),
            "gbb_rec": add(jnp.stack([p["g_receptive"].ravel(), p["b_receptive"].ravel(),
                                      p["bias_receptive"].ravel()])),
            "w_exp": add(p["w_expansion"]),
            "gb_exp": add(jnp.stack([p["g_expansion"].ravel(), p["b_expansion"].ravel()])),
        }
        has_res = "w_resample" in p
        if has_res:
            off["w_res"] = add(p["w_resample"])
            off["gb_res"] = add(jnp.stack([p["g_resample"].ravel(), p["b_resample"].ravel()]))
        metas.append({"off": off, "K": K, "has_resample": has_res})

    packed = jnp.concatenate(entries, axis=0)
    rpad = (-packed.shape[0]) % 8
    if rpad:
        packed = jnp.pad(packed, ((0, rpad), (0, 0)))
    return packed, metas


# ------------------------------- stage wrapper -------------------------------

def residual_stage_pallas(x_nchw, params_list, dil=1):
    """ResidualStage1D forward: x is NCHW with H == 1; output is NCHW (B, Cout, 1, W')."""
    B, Cin, H, W = x_nchw.shape
    assert H == 1, "1D stage expects NCHW input with H == 1"
    assert W % 2 == 0
    Cout = params_list[-1]["w_expansion"].shape[1]
    cmax = max(max(p["w_bottleneck"].shape[0], p["w_expansion"].shape[1])
               for p in params_list)

    packed, metas = _pack_stage_params(params_list, cmax)
    Lout = W
    for i, m in enumerate(metas):
        m["has_stride"] = (i == 0)          # ResidualStage1D: block 0 has stride (1, 2)
        if m["has_stride"]:
            assert m["has_resample"]
            Lout //= 2

    kernel = functools.partial(_stage_kernel, metas=metas, dil=dil)

    return pl.pallas_call(
        kernel,
        out_shape=jax.ShapeDtypeStruct((B, Cout, 1, Lout), x_nchw.dtype),
        grid=(B,),
        in_specs=[
            # per-sample NCHW slab, singleton dims squeezed -> kernel sees (Cin, W)
            pl.BlockSpec((None, Cin, None, W), lambda b: (b, 0, 0, 0)),
            # single packed parameter block, constant index_map -> fetched once
            pl.BlockSpec(packed.shape, lambda b: (0, 0)),
        ],
        out_specs=pl.BlockSpec((None, Cout, None, Lout), lambda b: (b, 0, 0, 0)),
        scratch_shapes=[pltpu.VMEM((W, cmax), jnp.float32)],     # pool-compaction scratch
        compiler_params=pltpu.CompilerParams(dimension_semantics=("parallel",)),
    )(x_nchw, packed)


# ------------------------------ parameters ------------------------------

def make_block_params(key, in_planes, out_planes, has_stride, kernel_w=3):
    planes = in_planes // 2                       # ResidualBlock1D.expansion = 2
    ks = jax.random.split(key, 5)
    sc = 0.1
    p = {
        "w_bottleneck": jax.random.normal(ks[0], (in_planes, planes), jnp.float32) * sc,
        "g_bottleneck": jnp.ones((1, planes), jnp.float32),
        "b_bottleneck": jnp.zeros((1, planes), jnp.float32),
        "w_receptive": jax.random.normal(ks[1], (kernel_w, planes, planes), jnp.float32) * sc,
        "bias_receptive": jax.random.normal(ks[2], (1, planes), jnp.float32) * sc,
        "g_receptive": jnp.ones((1, planes), jnp.float32),
        "b_receptive": jnp.zeros((1, planes), jnp.float32),
        "w_expansion": jax.random.normal(ks[3], (planes, out_planes), jnp.float32) * sc,
        "g_expansion": jnp.ones((1, out_planes), jnp.float32),
        "b_expansion": jnp.zeros((1, out_planes), jnp.float32),
    }
    if has_stride or in_planes != out_planes:
        p["w_resample"] = jax.random.normal(ks[4], (in_planes, out_planes), jnp.float32) * sc
        p["g_resample"] = jnp.ones((1, in_planes), jnp.float32)
        p["b_resample"] = jnp.zeros((1, in_planes), jnp.float32)
    return p


# ------------------------------ pure-JAX reference ------------------------------

def _ref_norm(x, g, b):
    mu = jnp.mean(x, axis=(1, 2), keepdims=True)
    var = jnp.mean((x - mu) ** 2, axis=(1, 2), keepdims=True)
    return (x - mu) / jnp.sqrt(var + EPS) * g.reshape(1, 1, -1) + b.reshape(1, 1, -1)


def _ref_pool(x):
    B, L, C = x.shape
    return x.reshape(B, L // 2, 2, C).mean(axis=2)


def _ref_convk(x, w, b, dil):
    K = w.shape[0]
    pad = (K // 2) * dil
    xp = jnp.pad(x, ((0, 0), (pad, pad), (0, 0)))
    L = x.shape[1]
    out = jnp.zeros((x.shape[0], L, w.shape[2]), jnp.float32) + b.reshape(1, 1, -1)
    for tap in range(K):
        out = out + jnp.einsum("blc,cd->bld", xp[:, tap * dil:tap * dil + L, :], w[tap])
    return out


def residual_block_ref(x, p, has_stride):
    if "w_resample" in p:
        idn = _ref_norm(x, p["g_resample"], p["b_resample"])
        if has_stride:
            idn = _ref_pool(idn)
        identity = jnp.einsum("blc,cd->bld", idn, p["w_resample"])
    else:
        identity = x
    h = jnp.einsum("blc,cd->bld", x, p["w_bottleneck"])
    h = jax.nn.relu(_ref_norm(h, p["g_bottleneck"], p["b_bottleneck"]))
    h = _ref_convk(h, p["w_receptive"], p["bias_receptive"], 1)
    h = jax.nn.relu(_ref_norm(h, p["g_receptive"], p["b_receptive"]))
    if has_stride:
        h = _ref_pool(h)
    h = jnp.einsum("blc,cd->bld", h, p["w_expansion"])
    h = jax.nn.relu(_ref_norm(h, p["g_expansion"], p["b_expansion"]))
    return h + identity


# ------------------------------ main ------------------------------

if __name__ == "__main__":
    B, in_planes, out_planes, W = 2, 8, 16, 16
    layer_depth = 2

    key = jax.random.PRNGKey(0)
    k_in, *pkeys = jax.random.split(key, layer_depth + 1)
    x = jax.random.normal(k_in, (B, in_planes, 1, W), jnp.float32)   # NCHW, H == 1

    params = []
    cin = in_planes
    for i in range(layer_depth):
        params.append(make_block_params(pkeys[i], cin, out_planes, has_stride=(i == 0)))
        cin = out_planes

    out = jax.block_until_ready(residual_stage_pallas(x, params))
    assert out.shape == (B, out_planes, 1, W // 2), out.shape

    # correctness check against a pure-JAX reference of the same math
    xr = jnp.transpose(x[:, :, 0, :], (0, 2, 1))
    with jax.default_matmul_precision("highest"):
        for i, p in enumerate(params):
            xr = residual_block_ref(xr, p, has_stride=(i == 0))
    ref = jnp.transpose(xr, (0, 2, 1))[:, :, None, :]
    max_err = float(jnp.max(jnp.abs(out - ref)))
    assert max_err < 5e-3, f"max abs err = {max_err}"

    print("KERNEL_OK")
</pallas_src>

<mosaic_0001>
module attributes {stable_mosaic.version = 11 : i64} {
  func.func @_stage_kernel(%arg0: i32, %arg1: memref<1x8x1x16xf32, #tpu.memory_space<vmem>>, %arg2: memref<96x16xf32, #tpu.memory_space<vmem>>, %arg3: memref<1x16x1x8xf32, #tpu.memory_space<vmem>>, %arg4: memref<16x16xf32, #tpu.memory_space<vmem>>) attributes {dimension_semantics = [#tpu.dimension_semantics<parallel>], iteration_bounds = array<i64: 2>, scalar_prefetch = 0 : i64, scratch_operands = 1 : i64, tpu.core_type = #tpu.core_type<tc>, window_params = [{transform_indices = @transform_0, window_bounds = array<i64: 1, 8, 1, 16>}, {pipeline_mode = #tpu.pipeline_mode<synchronous>, transform_indices = @transform_1, window_bounds = array<i64: 96, 16>}, {transform_indices = @transform_2, window_bounds = array<i64: 1, 16, 1, 8>}]} {
    %c0 = arith.constant 0 : index
    %c0_0 = arith.constant 0 : index
    %c0_1 = arith.constant 0 : index
    %c0_2 = arith.constant 0 : index
    %0 = vector.load %arg1[%c0, %c0_0, %c0_1, %c0_2] : memref<1x8x1x16xf32, #tpu.memory_space<vmem>>, vector<1x8x1x16xf32>
    %1 = vector.shape_cast %0 : vector<1x8x1x16xf32> to vector<8x16xf32>
    %2 = tpu.transpose %1, [1, 0] : vector<8x16xf32> -> vector<16x8xf32>
    %c39 = arith.constant 39 : index
    %c0_3 = arith.constant 0 : index
    %3 = vector.load %arg2[%c39, %c0_3] : memref<96x16xf32, #tpu.memory_space<vmem>>, vector<2x8xf32>
    %4 = vector.extract_strided_slice %3 {offsets = [0, 0], sizes = [1, 8], strides = [1, 1]} : vector<2x8xf32> to vector<1x8xf32>
    %5 = vector.extract_strided_slice %3 {offsets = [1, 0], sizes = [1, 8], strides = [1, 1]} : vector<2x8xf32> to vector<1x8xf32>
    %6 = vector.shape_cast %2 : vector<16x8xf32> to vector<1x16x8xf32>
    %cst = arith.constant dense<0.000000e+00> : vector<1xf32>
    %7 = vector.multi_reduction <add>, %6, %cst [1, 2] : vector<1x16x8xf32> to vector<1xf32>
    %8 = vector.shape_cast %7 : vector<1xf32> to vector<1x1x1xf32>
    %9 = vector.extract %8[0, 0, 0] : f32 from vector<1x1x1xf32>
    %10 = arith.mulf %2, %2 : vector<16x8xf32>
    %11 = vector.shape_cast %10 : vector<16x8xf32> to vector<1x16x8xf32>
    %cst_4 = arith.constant dense<0.000000e+00> : vector<1xf32>
    %12 = vector.multi_reduction <add>, %11, %cst_4 [1, 2] : vector<1x16x8xf32> to vector<1xf32>
    %13 = vector.shape_cast %12 : vector<1xf32> to vector<1x1x1xf32>
    %14 = vector.extract %13[0, 0, 0] : f32 from vector<1x1x1xf32>
    %cst_5 = arith.constant 7.812500e-03 : f32
    %15 = arith.mulf %9, %cst_5 : f32
    %cst_6 = arith.constant 7.812500e-03 : f32
    %16 = arith.mulf %14, %cst_6 : f32
    %17 = arith.mulf %15, %15 : f32
    %18 = arith.subf %16, %17 : f32
    %cst_7 = arith.constant 0.000000e+00 : f32
    %19 = arith.maximumf %18, %cst_7 : f32
    %20 = vector.broadcast %15 : f32 to vector<16x8xf32>
    %21 = arith.subf %2, %20 : vector<16x8xf32>
    %cst_8 = arith.constant 9.99999974E-6 : f32
    %22 = arith.addf %19, %cst_8 : f32
    %23 = math.rsqrt %22 : f32
    %24 = vector.broadcast %23 : f32 to vector<16x8xf32>
    %25 = arith.mulf %21, %24 : vector<16x8xf32>
    %26 = vector.broadcast %4 : vector<1x8xf32> to vector<16x8xf32>
    %27 = arith.mulf %25, %26 : vector<16x8xf32>
    %28 = vector.broadcast %5 : vector<1x8xf32> to vector<16x8xf32>
    %29 = arith.addf %27, %28 : vector<16x8xf32>
    %30 = vector.extract_strided_slice %29 {offsets = [1, 0], sizes = [15, 8], strides = [1, 1]} : vector<16x8xf32> to vector<15x8xf32>
    %cst_9 = arith.constant 0.000000e+00 : f32
    %31 = vector.broadcast %cst_9 : f32 to vector<1x8xf32>
    %32 = tpu.concatenate %30, %31 in 0 : vector<15x8xf32>, vector<1x8xf32> -> vector<16x8xf32>
    %33 = arith.addf %29, %32 : vector<16x8xf32>
    %cst_10 = arith.constant 5.000000e-01 : f32
    %34 = vector.broadcast %cst_10 : f32 to vector<16x8xf32>
    %35 = arith.mulf %33, %34 : vector<16x8xf32>
    %c0_11 = arith.constant 0 : index
    %c0_12 = arith.constant 0 : index
    %36 = vector.load %arg4[%c0_11, %c0_12] : memref<16x16xf32, #tpu.memory_space<vmem>>, vector<16x8xf32>
    tpu.vector_store %arg4[%c0_11, %c0_12], %35 {strides = array<i32>} : memref<16x16xf32, #tpu.memory_space<vmem>>, vector<16x8xf32>,
    %c0_13 = arith.constant 0 : index
    %c0_14 = arith.constant 0 : index
    %37 = tpu.strided_load %arg4[%c0_13, %c0_14] {strides = array<i32: 2, 1>} : memref<16x16xf32, #tpu.memory_space<vmem>>, vector<8x8xf32>
    %c31 = arith.constant 31 : index
    %c0_15 = arith.constant 0 : index
    %38 = vector.load %arg2[%c31, %c0_15] : memref<96x16xf32, #tpu.memory_space<vmem>>, vector<8x16xf32>
    %cst_16 = arith.constant dense<0.000000e+00> : vector<8x16xf32>
    %39 = tpu.matmul %37, %38, %cst_16 {dimension_numbers = #tpu.dot_dimension_numbers<[1], [0], [0], [1], [0, 0, 1, 1], [], []>} : vector<8x8xf32>, vector<8x16xf32>, vector<8x16xf32> -> vector<8x16xf32>
    %c0_17 = arith.constant 0 : index
    %c0_18 = arith.constant 0 : index
    %40 = vector.load %arg2[%c0_17, %c0_18] : memref<96x16xf32, #tpu.memory_space<vmem>>, vector<8x4xf32>
    %c8 = arith.constant 8 : index
    %c0_19 = arith.constant 0 : index
    %41 = vector.load %arg2[%c8, %c0_19] : memref<96x16xf32, #tpu.memory_space<vmem>>, vector<2x4xf32>
    %cst_20 = arith.constant dense<0.000000e+00> : vector<16x4xf32>
    %42 = tpu.matmul %2, %40, %cst_20 {dimension_numbers = #tpu.dot_dimension_numbers<[1], [0], [0], [1], [0, 0, 1, 1], [], []>} : vector<16x8xf32>, vector<8x4xf32>, vector<16x4xf32> -> vector<16x4xf32>
    %43 = vector.extract_strided_slice %41 {offsets = [0, 0], sizes = [1, 4], strides = [1, 1]} : vector<2x4xf32> to vector<1x4xf32>
    %44 = vector.extract_strided_slice %41 {offsets = [1, 0], sizes = [1, 4], strides = [1, 1]} : vector<2x4xf32> to vector<1x4xf32>
    %45 = vector.shape_cast %42 : vector<16x4xf32> to vector<1x16x4xf32>
    %cst_21 = arith.constant dense<0.000000e+00> : vector<1xf32>
    %46 = vector.multi_reduction <add>, %45, %cst_21 [1, 2] : vector<1x16x4xf32> to vector<1xf32>
    %47 = vector.shape_cast %46 : vector<1xf32> to vector<1x1x1xf32>
    %48 = vector.extract %47[0, 0, 0] : f32 from vector<1x1x1xf32>
    %49 = arith.mulf %42, %42 : vector<16x4xf32>
    %50 = vector.shape_cast %49 : vector<16x4xf32> to vector<1x16x4xf32>
    %cst_22 = arith.constant dense<0.000000e+00> : vector<1xf32>
    %51 = vector.multi_reduction <add>, %50, %cst_22 [1, 2] : vector<1x16x4xf32> to vector<1xf32>
    %52 = vector.shape_cast %51 : vector<1xf32> to vector<1x1x1xf32>
    %53 = vector.extract %52[0, 0, 0] : f32 from vector<1x1x1xf32>
    %cst_23 = arith.constant 1.562500e-02 : f32
    %54 = arith.mulf %48, %cst_23 : f32
    %cst_24 = arith.constant 1.562500e-02 : f32
    %55 = arith.mulf %53, %cst_24 : f32
    %56 = arith.mulf %54, %54 : f32
    %57 = arith.subf %55, %56 : f32
    %cst_25 = arith.constant 0.000000e+00 : f32
    %58 = arith.maximumf %57, %cst_25 : f32
    %59 = vector.broadcast %54 : f32 to vector<16x4xf32>
    %60 = arith.subf %42, %59 : vector<16x4xf32>
    %cst_26 = arith.constant 9.99999974E-6 : f32
    %61 = arith.addf %58, %cst_26 : f32
    %62 = math.rsqrt %61 : f32
    %63 = vector.broadcast %62 : f32 to vector<16x4xf32>
    %64 = arith.mulf %60, %63 : vector<16x4xf32>
    %65 = vector.broadcast %43 : vector<1x4xf32> to vector<16x4xf32>
    %66 = arith.mulf %64, %65 : vector<16x4xf32>
    %67 = vector.broadcast %44 : vector<1x4xf32> to vector<16x4xf32>
    %68 = arith.addf %66, %67 : vector<16x4xf32>
    %cst_27 = arith.constant 0.000000e+00 : f32
    %69 = vector.broadcast %cst_27 : f32 to vector<16x4xf32>
    %70 = arith.maximumf %68, %69 : vector<16x4xf32>
    %cst_28 = arith.constant 0.000000e+00 : f32
    %71 = vector.broadcast %cst_28 : f32 to vector<1x4xf32>
    %72 = tpu.concatenate %71, %70, %71 in 0 : vector<1x4xf32>, vector<16x4xf32>, vector<1x4xf32> -> vector<18x4xf32>
    %c10 = arith.constant 10 : index
    %c0_29 = arith.constant 0 : index
    %73 = vector.load %arg2[%c10, %c0_29] : memref<96x16xf32, #tpu.memory_space<vmem>>, vector<4x4xf32>
    %74 = vector.extract_strided_slice %72 {offsets = [0, 0], sizes = [16, 4], strides = [1, 1]} : vector<18x4xf32> to vector<16x4xf32>
    %cst_30 = arith.constant dense<0.000000e+00> : vector<16x4xf32>
    %75 = tpu.matmul %74, %73, %cst_30 {dimension_numbers = #tpu.dot_dimension_numbers<[1], [0], [0], [1], [0, 0, 1, 1], [], []>} : vector<16x4xf32>, vector<4x4xf32>, vector<16x4xf32> -> vector<16x4xf32>
    %c14 = arith.constant 14 : index
    %c0_31 = arith.constant 0 : index
    %76 = vector.load %arg2[%c14, %c0_31] : memref<96x16xf32, #tpu.memory_space<vmem>>, vector<4x4xf32>
    %77 = vector.extract_strided_slice %72 {offsets = [1, 0], sizes = [16, 4], strides = [1, 1]} : vector<18x4xf32> to vector<16x4xf32>
    %cst_32 = arith.constant dense<0.000000e+00> : vector<16x4xf32>
    %78 = tpu.matmul %77, %76, %cst_32 {dimension_numbers = #tpu.dot_dimension_numbers<[1], [0], [0], [1], [0, 0, 1, 1], [], []>} : vector<16x4xf32>, vector<4x4xf32>, vector<16x4xf32> -> vector<16x4xf32>
    %79 = arith.addf %75, %78 : vector<16x4xf32>
    %c18 = arith.constant 18 : index
    %c0_33 = arith.constant 0 : index
    %80 = vector.load %arg2[%c18, %c0_33] : memref<96x16xf32, #tpu.memory_space<vmem>>, vector<4x4xf32>
    %81 = vector.extract_strided_slice %72 {offsets = [2, 0], sizes = [16, 4], strides = [1, 1]} : vector<18x4xf32> to vector<16x4xf32>
    %cst_34 = arith.constant dense<0.000000e+00> : vector<16x4xf32>
    %82 = tpu.matmul %81, %80, %cst_34 {dimension_numbers = #tpu.dot_dimension_numbers<[1], [0], [0], [1], [0, 0, 1, 1], [], []>} : vector<16x4xf32>, vector<4x4xf32>, vector<16x4xf32> -> vector<16x4xf32>
    %83 = arith.addf %79, %82 : vector<16x4xf32>
    %c22 = arith.constant 22 : index
    %c0_35 = arith.constant 0 : index
    %84 = vector.load %arg2[%c22, %c0_35] : memref<96x16xf32, #tpu.memory_space<vmem>>, vector<3x4xf32>
    %85 = vector.extract_strided_slice %84 {offsets = [2, 0], sizes = [1, 4], strides = [1, 1]} : vector<3x4xf32> to vector<1x4xf32>
    %86 = vector.broadcast %85 : vector<1x4xf32> to vector<16x4xf32>
    %87 = arith.addf %83, %86 : vector<16x4xf32>
    %88 = vector.extract_strided_slice %84 {offsets = [0, 0], sizes = [1, 4], strides = [1, 1]} : vector<3x4xf32> to vector<1x4xf32>
    %89 = vector.extract_strided_slice %84 {offsets = [1, 0], sizes = [1, 4], strides = [1, 1]} : vector<3x4xf32> to vector<1x4xf32>
    %90 = vector.shape_cast %87 : vector<16x4xf32> to vector<1x16x4xf32>
    %cst_36 = arith.constant dense<0.000000e+00> : vector<1xf32>
    %91 = vector.multi_reduction <add>, %90, %cst_36 [1, 2] : vector<1x16x4xf32> to vector<1xf32>
    %92 = vector.shape_cast %91 : vector<1xf32> to vector<1x1x1xf32>
    %93 = vector.extract %92[0, 0, 0] : f32 from vector<1x1x1xf32>
    %94 = arith.mulf %87, %87 : vector<16x4xf32>
    %95 = vector.shape_cast %94 : vector<16x4xf32> to vector<1x16x4xf32>
    %cst_37 = arith.constant dense<0.000000e+00> : vector<1xf32>
    %96 = vector.multi_reduction <add>, %95, %cst_37 [1, 2] : vector<1x16x4xf32> to vector<1xf32>
    %97 = vector.shape_cast %96 : vector<1xf32> to vector<1x1x1xf32>
    %98 = vector.extract %97[0, 0, 0] : f32 from vector<1x1x1xf32>
    %cst_38 = arith.constant 1.562500e-02 : f32
    %99 = arith.mulf %93, %cst_38 : f32
    %cst_39 = arith.constant 1.562500e-02 : f32
    %100 = arith.mulf %98, %cst_39 : f32
    %101 = arith.mulf %99, %99 : f32
    %102 = arith.subf %100, %101 : f32
    %cst_40 = arith.constant 0.000000e+00 : f32
    %103 = arith.maximumf %102, %cst_40 : f32
    %104 = vector.broadcast %99 : f32 to vector<16x4xf32>
    %105 = arith.subf %87, %104 : vector<16x4xf32>
    %cst_41 = arith.constant 9.99999974E-6 : f32
    %106 = arith.addf %103, %cst_41 : f32
    %107 = math.rsqrt %106 : f32
    %108 = vector.broadcast %107 : f32 to vector<16x4xf32>
    %109 = arith.mulf %105, %108 : vector<16x4xf32>
    %110 = vector.broadcast %88 : vector<1x4xf32> to vector<16x4xf32>
    %111 = arith.mulf %109, %110 : vector<16x4xf32>
    %112 = vector.broadcast %89 : vector<1x4xf32> to vector<16x4xf32>
    %113 = arith.addf %111, %112 : vector<16x4xf32>
    %cst_42 = arith.constant 0.000000e+00 : f32
    %114 = vector.broadcast %cst_42 : f32 to vector<16x4xf32>
    %115 = arith.maximumf %113, %114 : vector<16x4xf32>
    %116 = vector.extract_strided_slice %115 {offsets = [1, 0], sizes = [15, 4], strides = [1, 1]} : vector<16x4xf32> to vector<15x4xf32>
    %cst_43 = arith.constant 0.000000e+00 : f32
    %117 = vector.broadcast %cst_43 : f32 to vector<1x4xf32>
    %118 = tpu.concatenate %116, %117 in 0 : vector<15x4xf32>, vector<1x4xf32> -> vector<16x4xf32>
    %119 = arith.addf %115, %118 : vector<16x4xf32>
    %cst_44 = arith.constant 5.000000e-01 : f32
    %120 = vector.broadcast %cst_44 : f32 to vector<16x4xf32>
    %121 = arith.mulf %119, %120 : vector<16x4xf32>
    %c0_45 = arith.constant 0 : index
    %c0_46 = arith.constant 0 : index
    %122 = vector.load %arg4[%c0_45, %c0_46] : memref<16x16xf32, #tpu.memory_space<vmem>>, vector<16x4xf32>
    tpu.vector_store %arg4[%c0_45, %c0_46], %121 {strides = array<i32>} : memref<16x16xf32, #tpu.memory_space<vmem>>, vector<16x4xf32>,
    %c0_47 = arith.constant 0 : index
    %c0_48 = arith.constant 0 : index
    %123 = tpu.strided_load %arg4[%c0_47, %c0_48] {strides = array<i32: 2, 1>} : memref<16x16xf32, #tpu.memory_space<vmem>>, vector<8x4xf32>
    %c29 = arith.constant 29 : index
    %c0_49 = arith.constant 0 : index
    %124 = vector.load %arg2[%c29, %c0_49] : memref<96x16xf32, #tpu.memory_space<vmem>>, vector<2x16xf32>
    %c25 = arith.constant 25 : index
    %c0_50 = arith.constant 0 : index
    %125 = vector.load %arg2[%c25, %c0_50] : memref<96x16xf32, #tpu.memory_space<vmem>>, vector<4x16xf32>
    %cst_51 = arith.constant dense<0.000000e+00> : vector<8x16xf32>
    %126 = tpu.matmul %123, %125, %cst_51 {dimension_numbers = #tpu.dot_dimension_numbers<[1], [0], [0], [1], [0, 0, 1, 1], [], []>} : vector<8x4xf32>, vector<4x16xf32>, vector<8x16xf32> -> vector<8x16xf32>
    %127 = vector.extract_strided_slice %124 {offsets = [0, 0], sizes = [1, 16], strides = [1, 1]} : vector<2x16xf32> to vector<1x16xf32>
    %128 = vector.extract_strided_slice %124 {offsets = [1, 0], sizes = [1, 16], strides = [1, 1]} : vector<2x16xf32> to vector<1x16xf32>
    %129 = vector.shape_cast %126 : vector<8x16xf32> to vector<1x8x16xf32>
    %cst_52 = arith.constant dense<0.000000e+00> : vector<1xf32>
    %130 = vector.multi_reduction <add>, %129, %cst_52 [1, 2] : vector<1x8x16xf32> to vector<1xf32>
    %131 = vector.shape_cast %130 : vector<1xf32> to vector<1x1x1xf32>
    %132 = vector.extract %131[0, 0, 0] : f32 from vector<1x1x1xf32>
    %133 = arith.mulf %126, %126 : vector<8x16xf32>
    %134 = vector.shape_cast %133 : vector<8x16xf32> to vector<1x8x16xf32>
    %cst_53 = arith.constant dense<0.000000e+00> : vector<1xf32>
    %135 = vector.multi_reduction <add>, %134, %cst_53 [1, 2] : vector<1x8x16xf32> to vector<1xf32>
    %136 = vector.shape_cast %135 : vector<1xf32> to vector<1x1x1xf32>
    %137 = vector.extract %136[0, 0, 0] : f32 from vector<1x1x1xf32>
    %cst_54 = arith.constant 7.812500e-03 : f32
    %138 = arith.mulf %132, %cst_54 : f32
    %cst_55 = arith.constant 7.812500e-03 : f32
    %139 = arith.mulf %137, %cst_55 : f32
    %140 = arith.mulf %138, %138 : f32
    %141 = arith.subf %139, %140 : f32
    %cst_56 = arith.constant 0.000000e+00 : f32
    %142 = arith.maximumf %141, %cst_56 : f32
    %143 = vector.broadcast %138 : f32 to vector<8x16xf32>
    %144 = arith.subf %126, %143 : vector<8x16xf32>
    %cst_57 = arith.constant 9.99999974E-6 : f32
    %145 = arith.addf %142, %cst_57 : f32
    %146 = math.rsqrt %145 : f32
    %147 = vector.broadcast %146 : f32 to vector<8x16xf32>
    %148 = arith.mulf %144, %147 : vector<8x16xf32>
    %149 = vector.broadcast %127 : vector<1x16xf32> to vector<8x16xf32>
    %150 = arith.mulf %148, %149 : vector<8x16xf32>
    %151 = vector.broadcast %128 : vector<1x16xf32> to vector<8x16xf32>
    %152 = arith.addf %150, %151 : vector<8x16xf32>
    %cst_58 = arith.constant 0.000000e+00 : f32
    %153 = vector.broadcast %cst_58 : f32 to vector<8x16xf32>
    %154 = arith.maximumf %152, %153 : vector<8x16xf32>
    %155 = arith.addf %154, %39 : vector<8x16xf32>
    %c41 = arith.constant 41 : index
    %c0_59 = arith.constant 0 : index
    %156 = vector.load %arg2[%c41, %c0_59] : memref<96x16xf32, #tpu.memory_space<vmem>>, vector<16x8xf32>
    %c57 = arith.constant 57 : index
    %c0_60 = arith.constant 0 : index
    %157 = vector.load %arg2[%c57, %c0_60] : memref<96x16xf32, #tpu.memory_space<vmem>>, vector<2x8xf32>
    %cst_61 = arith.constant dense<0.000000e+00> : vector<8x8xf32>
    %158 = tpu.matmul %155, %156, %cst_61 {dimension_numbers = #tpu.dot_dimension_numbers<[1], [0], [0], [1], [0, 0, 1, 1], [], []>} : vector<8x16xf32>, vector<16x8xf32>, vector<8x8xf32> -> vector<8x8xf32>
    %159 = vector.extract_strided_slice %157 {offsets = [0, 0], sizes = [1, 8], strides = [1, 1]} : vector<2x8xf32> to vector<1x8xf32>
    %160 = vector.extract_strided_slice %157 {offsets = [1, 0], sizes = [1, 8], strides = [1, 1]} : vector<2x8xf32> to vector<1x8xf32>
    %161 = vector.shape_cast %158 : vector<8x8xf32> to vector<1x8x8xf32>
    %cst_62 = arith.constant dense<0.000000e+00> : vector<1xf32>
    %162 = vector.multi_reduction <add>, %161, %cst_62 [1, 2] : vector<1x8x8xf32> to vector<1xf32>
    %163 = vector.shape_cast %162 : vector<1xf32> to vector<1x1x1xf32>
    %164 = vector.extract %163[0, 0, 0] : f32 from vector<1x1x1xf32>
    %165 = arith.mulf %158, %158 : vector<8x8xf32>
    %166 = vector.shape_cast %165 : vector<8x8xf32> to vector<1x8x8xf32>
    %cst_63 = arith.constant dense<0.000000e+00> : vector<1xf32>
    %167 = vector.multi_reduction <add>, %166, %cst_63 [1, 2] : vector<1x8x8xf32> to vector<1xf32>
    %168 = vector.shape_cast %167 : vector<1xf32> to vector<1x1x1xf32>
    %169 = vector.extract %168[0, 0, 0] : f32 from vector<1x1x1xf32>
    %cst_64 = arith.constant 1.562500e-02 : f32
    %170 = arith.mulf %164, %cst_64 : f32
    %cst_65 = arith.constant 1.562500e-02 : f32
    %171 = arith.mulf %169, %cst_65 : f32
    %172 = arith.mulf %170, %170 : f32
    %173 = arith.subf %171, %172 : f32
    %cst_66 = arith.constant 0.000000e+00 : f32
    %174 = arith.maximumf %173, %cst_66 : f32
    %175 = vector.broadcast %170 : f32 to vector<8x8xf32>
    %176 = arith.subf %158, %175 : vector<8x8xf32>
    %cst_67 = arith.constant 9.99999974E-6 : f32
    %177 = arith.addf %174, %cst_67 : f32
    %178 = math.rsqrt %177 : f32
    %179 = vector.broadcast %178 : f32 to vector<8x8xf32>
    %180 = arith.mulf %176, %179 : vector<8x8xf32>
    %181 = vector.broadcast %159 : vector<1x8xf32> to vector<8x8xf32>
    %182 = arith.mulf %180, %181 : vector<8x8xf32>
    %183 = vector.broadcast %160 : vector<1x8xf32> to vector<8x8xf32>
    %184 = arith.addf %182, %183 : vector<8x8xf32>
    %cst_68 = arith.constant 0.000000e+00 : f32
    %185 = vector.broadcast %cst_68 : f32 to vector<8x8xf32>
    %186 = arith.maximumf %184, %185 : vector<8x8xf32>
    %cst_69 = arith.constant 0.000000e+00 : f32
    %187 = vector.broadcast %cst_69 : f32 to vector<1x8xf32>
    %188 = tpu.concatenate %187, %186, %187 in 0 : vector<1x8xf32>, vector<8x8xf32>, vector<1x8xf32> -> vector<10x8xf32>
    %c59 = arith.constant 59 : index
    %c0_70 = arith.constant 0 : index
    %189 = vector.load %arg2[%c59, %c0_70] : memref<96x16xf32, #tpu.memory_space<vmem>>, vector<8x8xf32>
    %190 = vector.extract_strided_slice %188 {offsets = [0, 0], sizes = [8, 8], strides = [1, 1]} : vector<10x8xf32> to vector<8x8xf32>
    %cst_71 = arith.constant dense<0.000000e+00> : vector<8x8xf32>
    %191 = tpu.matmul %190, %189, %cst_71 {dimension_numbers = #tpu.dot_dimension_numbers<[1], [0], [0], [1], [0, 0, 1, 1], [], []>} : vector<8x8xf32>, vector<8x8xf32>, vector<8x8xf32> -> vector<8x8xf32>
    %c67 = arith.constant 67 : index
    %c0_72 = arith.constant 0 : index
    %192 = vector.load %arg2[%c67, %c0_72] : memref<96x16xf32, #tpu.memory_space<vmem>>, vector<8x8xf32>
    %193 = vector.extract_strided_slice %188 {offsets = [1, 0], sizes = [8, 8], strides = [1, 1]} : vector<10x8xf32> to vector<8x8xf32>
    %cst_73 = arith.constant dense<0.000000e+00> : vector<8x8xf32>
    %194 = tpu.matmul %193, %192, %cst_73 {dimension_numbers = #tpu.dot_dimension_numbers<[1], [0], [0], [1], [0, 0, 1, 1], [], []>} : vector<8x8xf32>, vector<8x8xf32>, vector<8x8xf32> -> vector<8x8xf32>
    %195 = arith.addf %191, %194 : vector<8x8xf32>
    %c75 = arith.constant 75 : index
    %c0_74 = arith.constant 0 : index
    %196 = vector.load %arg2[%c75, %c0_74] : memref<96x16xf32, #tpu.memory_space<vmem>>, vector<8x8xf32>
    %197 = vector.extract_strided_slice %188 {offsets = [2, 0], sizes = [8, 8], strides = [1, 1]} : vector<10x8xf32> to vector<8x8xf32>
    %cst_75 = arith.constant dense<0.000000e+00> : vector<8x8xf32>
    %198 = tpu.matmul %197, %196, %cst_75 {dimension_numbers = #tpu.dot_dimension_numbers<[1], [0], [0], [1], [0, 0, 1, 1], [], []>} : vector<8x8xf32>, vector<8x8xf32>, vector<8x8xf32> -> vector<8x8xf32>
    %199 = arith.addf %195, %198 : vector<8x8xf32>
    %c83 = arith.constant 83 : index
    %c0_76 = arith.constant 0 : index
    %200 = vector.load %arg2[%c83, %c0_76] : memref<96x16xf32, #tpu.memory_space<vmem>>, vector<3x8xf32>
    %201 = vector.extract_strided_slice %200 {offsets = [2, 0], sizes = [1, 8], strides = [1, 1]} : vector<3x8xf32> to vector<1x8xf32>
    %202 = vector.broadcast %201 : vector<1x8xf32> to vector<8x8xf32>
    %203 = arith.addf %199, %202 : vector<8x8xf32>
    %204 = vector.extract_strided_slice %200 {offsets = [0, 0], sizes = [1, 8], strides = [1, 1]} : vector<3x8xf32> to vector<1x8xf32>
    %205 = vector.extract_strided_slice %200 {offsets = [1, 0], sizes = [1, 8], strides = [1, 1]} : vector<3x8xf32> to vector<1x8xf32>
    %206 = vector.shape_cast %203 : vector<8x8xf32> to vector<1x8x8xf32>
    %cst_77 = arith.constant dense<0.000000e+00> : vector<1xf32>
    %207 = vector.multi_reduction <add>, %206, %cst_77 [1, 2] : vector<1x8x8xf32> to vector<1xf32>
    %208 = vector.shape_cast %207 : vector<1xf32> to vector<1x1x1xf32>
    %209 = vector.extract %208[0, 0, 0] : f32 from vector<1x1x1xf32>
    %210 = arith.mulf %203, %203 : vector<8x8xf32>
    %211 = vector.shape_cast %210 : vector<8x8xf32> to vector<1x8x8xf32>
    %cst_78 = arith.constant dense<0.000000e+00> : vector<1xf32>
    %212 = vector.multi_reduction <add>, %211, %cst_78 [1, 2] : vector<1x8x8xf32> to vector<1xf32>
    %213 = vector.shape_cast %212 : vector<1xf32> to vector<1x1x1xf32>
    %214 = vector.extract %213[0, 0, 0] : f32 from vector<1x1x1xf32>
    %cst_79 = arith.constant 1.562500e-02 : f32
    %215 = arith.mulf %209, %cst_79 : f32
    %cst_80 = arith.constant 1.562500e-02 : f32
    %216 = arith.mulf %214, %cst_80 : f32
    %217 = arith.mulf %215, %215 : f32
    %218 = arith.subf %216, %217 : f32
    %cst_81 = arith.constant 0.000000e+00 : f32
    %219 = arith.maximumf %218, %cst_81 : f32
    %220 = vector.broadcast %215 : f32 to vector<8x8xf32>
    %221 = arith.subf %203, %220 : vector<8x8xf32>
    %cst_82 = arith.constant 9.99999974E-6 : f32
    %222 = arith.addf %219, %cst_82 : f32
    %223 = math.rsqrt %222 : f32
    %224 = vector.broadcast %223 : f32 to vector<8x8xf32>
    %225 = arith.mulf %221, %224 : vector<8x8xf32>
    %226 = vector.broadcast %204 : vector<1x8xf32> to vector<8x8xf32>
    %227 = arith.mulf %225, %226 : vector<8x8xf32>
    %228 = vector.broadcast %205 : vector<1x8xf32> to vector<8x8xf32>
    %229 = arith.addf %227, %228 : vector<8x8xf32>
    %cst_83 = arith.constant 0.000000e+00 : f32
    %230 = vector.broadcast %cst_83 : f32 to vector<8x8xf32>
    %231 = arith.maximumf %229, %230 : vector<8x8xf32>
    %c94 = arith.constant 94 : index
    %c0_84 = arith.constant 0 : index
    %232 = vector.load %arg2[%c94, %c0_84] : memref<96x16xf32, #tpu.memory_space<vmem>>, vector<2x16xf32>
    %c86 = arith.constant 86 : index
    %c0_85 = arith.constant 0 : index
    %233 = vector.load %arg2[%c86, %c0_85] : memref<96x16xf32, #tpu.memory_space<vmem>>, vector<8x16xf32>
    %cst_86 = arith.constant dense<0.000000e+00> : vector<8x16xf32>
    %234 = tpu.matmul %231, %233, %cst_86 {dimension_numbers = #tpu.dot_dimension_numbers<[1], [0], [0], [1], [0, 0, 1, 1], [], []>} : vector<8x8xf32>, vector<8x16xf32>, vector<8x16xf32> -> vector<8x16xf32>
    %235 = vector.extract_strided_slice %232 {offsets = [0, 0], sizes = [1, 16], strides = [1, 1]} : vector<2x16xf32> to vector<1x16xf32>
    %236 = vector.extract_strided_slice %232 {offsets = [1, 0], sizes = [1, 16], strides = [1, 1]} : vector<2x16xf32> to vector<1x16xf32>
    %237 = vector.shape_cast %234 : vector<8x16xf32> to vector<1x8x16xf32>
    %cst_87 = arith.constant dense<0.000000e+00> : vector<1xf32>
    %238 = vector.multi_reduction <add>, %237, %cst_87 [1, 2] : vector<1x8x16xf32> to vector<1xf32>
    %239 = vector.shape_cast %238 : vector<1xf32> to vector<1x1x1xf32>
    %240 = vector.extract %239[0, 0, 0] : f32 from vector<1x1x1xf32>
    %241 = arith.mulf %234, %234 : vector<8x16xf32>
    %242 = vector.shape_cast %241 : vector<8x16xf32> to vector<1x8x16xf32>
    %cst_88 = arith.constant dense<0.000000e+00> : vector<1xf32>
    %243 = vector.multi_reduction <add>, %242, %cst_88 [1, 2] : vector<1x8x16xf32> to vector<1xf32>
    %244 = vector.shape_cast %243 : vector<1xf32> to vector<1x1x1xf32>
    %245 = vector.extract %244[0, 0, 0] : f32 from vector<1x1x1xf32>
    %cst_89 = arith.constant 7.812500e-03 : f32
    %246 = arith.mulf %240, %cst_89 : f32
    %cst_90 = arith.constant 7.812500e-03 : f32
    %247 = arith.mulf %245, %cst_90 : f32
    %248 = arith.mulf %246, %246 : f32
    %249 = arith.subf %247, %248 : f32
    %cst_91 = arith.constant 0.000000e+00 : f32
    %250 = arith.maximumf %249, %cst_91 : f32
    %251 = vector.broadcast %246 : f32 to vector<8x16xf32>
    %252 = arith.subf %234, %251 : vector<8x16xf32>
    %cst_92 = arith.constant 9.99999974E-6 : f32
    %253 = arith.addf %250, %cst_92 : f32
    %254 = math.rsqrt %253 : f32
    %255 = vector.broadcast %254 : f32 to vector<8x16xf32>
    %256 = arith.mulf %252, %255 : vector<8x16xf32>
    %257 = vector.broadcast %235 : vector<1x16xf32> to vector<8x16xf32>
    %258 = arith.mulf %256, %257 : vector<8x16xf32>
    %259 = vector.broadcast %236 : vector<1x16xf32> to vector<8x16xf32>
    %260 = arith.addf %258, %259 : vector<8x16xf32>
    %cst_93 = arith.constant 0.000000e+00 : f32
    %261 = vector.broadcast %cst_93 : f32 to vector<8x16xf32>
    %262 = arith.maximumf %260, %261 : vector<8x16xf32>
    %263 = arith.addf %262, %155 : vector<8x16xf32>
    %264 = tpu.transpose %263, [1, 0] : vector<8x16xf32> -> vector<16x8xf32>
    %c0_94 = arith.constant 0 : index
    %c0_95 = arith.constant 0 : index
    %c0_96 = arith.constant 0 : index
    %c0_97 = arith.constant 0 : index
    %265 = vector.load %arg3[%c0_94, %c0_95, %c0_96, %c0_97] : memref<1x16x1x8xf32, #tpu.memory_space<vmem>>, vector<1x16x1x8xf32>
    %266 = vector.shape_cast %265 : vector<1x16x1x8xf32> to vector<16x8xf32>
    %267 = vector.shape_cast %264 : vector<16x8xf32> to vector<1x16x1x8xf32>
    tpu.vector_store %arg3[%c0_94, %c0_95, %c0_96, %c0_97], %267 {strides = array<i32>} : memref<1x16x1x8xf32, #tpu.memory_space<vmem>>, vector<1x16x1x8xf32>,
    return
  }
  func.func @transform_0(%arg0: i32) -> (i32, i32, i32, i32) {
    %c0_i32 = arith.constant 0 : i32
    %c0_i32_0 = arith.constant 0 : i32
    %c0_i32_1 = arith.constant 0 : i32
    %c0_i32_2 = arith.constant 0 : i32
    return %arg0, %c0_i32, %c0_i32_0, %c0_i32_1 : i32, i32, i32, i32
  }
  func.func @transform_1(%arg0: i32) -> (i32, i32) {
    %c0_i32 = arith.constant 0 : i32
    %c0_i32_0 = arith.constant 0 : i32
    %c0_i32_1 = arith.constant 0 : i32
    return %c0_i32, %c0_i32_0 : i32, i32
  }
  func.func @transform_2(%arg0: i32) -> (i32, i32, i32, i32) {
    %c0_i32 = arith.constant 0 : i32
    %c0_i32_0 = arith.constant 0 : i32
    %c0_i32_1 = arith.constant 0 : i32
    %c0_i32_2 = arith.constant 0 : i32
    return %arg0, %c0_i32, %c0_i32_0, %c0_i32_1 : i32, i32, i32, i32
  }
}

</mosaic_0001>

<llo_original>
// kernel: tpu_custom_call.1
$region0: #{tpu_custom_call.1}
  #allocation0 [shape = 'u32[]', space=smem, size = 0x4, offset = 0x4, fixed_abs, tag = 'smem constant byte address 0x4 - core index']
  #allocation1 [shape = 'u32[72,128]{1,0:T(1,128)}', space=vmem, size = 0x9000, scoped, tag = 'internal scratch']
  #allocation2 [shape = 'f32[16,16]{1,0:T(8,128)}', space=vmem, size = 0x2000, scoped, tag = 'scratch operand']
  %s0 = inlined_call_operand.vmem [shape: f32[2,8,1,16], index: 0, kind: input, shape index: {}]
  %s1 = inlined_call_operand.vmem [shape: f32[96,16], index: 1, kind: input, shape index: {}]
  %s2 = inlined_call_operand.vmem [shape: f32[2,16,1,8], index: 2, kind: output, shape index: {}]
  %s3 = sld [smem:[#allocation0]]
  $region41: #{tpu_custom_call.1} parent=0
    _
  %s5 = ssub.s32 1, %s3
  %s6 = scalar_select 0, %s5, %s3
  loop: start=0, step=1, limit=4
  $region2: #{tpu_custom_call.1} parent=0 // loop_pre_header
    _
  $region3: #{tpu_custom_call.1} parent=0 // loop_header
    %s8 = sphi 0, %s12
    %p9 = scmp.ge.s32.totalorder %s8, 4
    %s18 = sphi 0, %s20
    %s21 = sphi 0, %s18
    %s22 = sphi 0, %s21
    %s38 = sphi 0, %s22
    %s42 = sphi 0, %s42
    %s44 = sphi 0, %s42
    %s45 = sphi 0, %s44
    %s59 = sphi 0, %s45
    %s65 = sphi 0, %s67
    %s68 = sphi 0, %s65
    %s69 = sphi 0, %s68
    %s85 = sphi 0, %s69
  $region4: #{tpu_custom_call.1} parent=0 // loop_header_branch
    %11 = sbr.rel (%p9) target = $region8
  $region5: #{tpu_custom_call.1} parent=0 // loop_body
    %s13 = ssub.s32 %s8, 1
    %s14 = ssub.s32 %s8, 2
    %s15 = sadd.s32 %s8, 1
    %s16 = ssub.s32 %s8, %s15
    %p17 = scmp.eq.s32.totalorder %s16, 0
    %s19 = sadd.s32 %s18, 1
    %s20 = scalar_select %p17, %s18, %s19
    %p23 = pneg %p17
    %p24 = scmp.eq.s32.totalorder %s8, 1
    %p25 = por %p23, %p24
    %p26 = scmp.ne.s32.totalorder %s18, %s21
    %p27 = scmp.eq.s32.totalorder %s8, 0
    %p28 = por %p26, %p27
    %p29 = scmp.ne.s32.totalorder %s18, %s21
    %p30 = scmp.eq.s32.totalorder %s13, 1
    %p31 = por %p29, %p30
    %p32 = scmp.ne.s32.totalorder %s21, %s22
    %p33 = scmp.eq.s32.totalorder %s13, 0
    %p34 = por %p32, %p33
    %p35 = scmp.ne.s32.totalorder %s21, %s22
    %p36 = scmp.eq.s32.totalorder %s14, 1
    %p37 = por %p35, %p36
    %p39 = scmp.ne.s32.totalorder %s22, %s38
    %p40 = scmp.eq.s32.totalorder %s14, 0
    %p41 = por %p39, %p40
    %s43 = sadd.s32 %s42, 1
    %p46 = scmp.eq.s32.totalorder %s8, 1
    %p47 = scmp.ne.s32.totalorder %s42, %s44
    %p48 = scmp.eq.s32.totalorder %s8, 0
    %p49 = por %p47, %p48
    %p50 = scmp.ne.s32.totalorder %s42, %s44
    %p51 = scmp.eq.s32.totalorder %s13, 1
    %p52 = por %p50, %p51
    %p53 = scmp.ne.s32.totalorder %s44, %s45
    %p54 = scmp.eq.s32.totalorder %s13, 0
    %p55 = por %p53, %p54
    %p56 = scmp.ne.s32.totalorder %s44, %s45
    %p57 = scmp.eq.s32.totalorder %s14, 1
    %p58 = por %p56, %p57
    %p60 = scmp.ne.s32.totalorder %s45, %s59
    %p61 = scmp.eq.s32.totalorder %s14, 0
    %p62 = por %p60, %p61
    %s63 = ssub.s32 %s8, %s15
    %p64 = scmp.eq.s32.totalorder %s63, 0
    %s66 = sadd.s32 %s65, 1
    %s67 = scalar_select %p64, %s65, %s66
    %p70 = pneg %p64
    %p71 = scmp.eq.s32.totalorder %s8, 1
    %p72 = por %p70, %p71
    %p73 = scmp.ne.s32.totalorder %s65, %s68
    %p74 = scmp.eq.s32.totalorder %s8, 0
    %p75 = por %p73, %p74
    %p76 = scmp.ne.s32.totalorder %s65, %s68
    %p77 = scmp.eq.s32.totalorder %s13, 1
    %p78 = por %p76, %p77
    %p79 = scmp.ne.s32.totalorder %s68, %s69
    %p80 = scmp.eq.s32.totalorder %s13, 0
    %p81 = por %p79, %p80
    %p82 = scmp.ne.s32.totalorder %s68, %s69
    %p83 = scmp.eq.s32.totalorder %s14, 1
    %p84 = por %p82, %p83
    %p86 = scmp.ne.s32.totalorder %s69, %s85
    %p87 = scmp.eq.s32.totalorder %s14, 0
    %p88 = por %p86, %p87
    %p89 = scmp.le.s32.totalorder 1, %s8
    %p90 = scmp.lt.s32.totalorder %s8, 3
    %p91 = pnand %p89, %p90
    %p92 = pneg %p91
    // Predicated region
    $region9: #{tpu_custom_call.1} parent=5 // pred_check
      _
    $region10: #{tpu_custom_call.1} parent=5 // pred_check_branch
      %94 = sbr.rel (%p91) target = $region12
    $region11: #{tpu_custom_call.1} parent=5 // pred_region
      %s95 = ssub.s32 %s8, 1
      // Predicated region
      $region13: #{tpu_custom_call.1} parent=11 // pred_check
        %p96 = pneg %p55
      $region14: #{tpu_custom_call.1} parent=11 // pred_check_branch
        %98 = sbr.rel (%p96) target = $region16
      $region15: #{tpu_custom_call.1} parent=11 // pred_region
        _
      $region16: #{tpu_custom_call.1} parent=11 // pred_fallthru
        _
    $region12: #{tpu_custom_call.1} parent=5 // pred_fallthru
      _
    %p99 = scmp.lt.s32.totalorder %s8, 2
    // Predicated region
    $region17: #{tpu_custom_call.1} parent=5 // pred_check
      %p100 = pneg %p99
    $region18: #{tpu_custom_call.1} parent=5 // pred_check_branch
      %102 = sbr.rel (%p100) target = $region20
    $region19: #{tpu_custom_call.1} parent=5 // pred_region
      // Predicated region
      $region21: #{tpu_custom_call.1} parent=19 // pred_check
        %p103 = pneg %p28
      $region22: #{tpu_custom_call.1} parent=19 // pred_check_branch
        %105 = sbr.rel (%p103) target = $region24
      $region23: #{tpu_custom_call.1} parent=19 // pred_region
        %p106 = scmp.lt.s32.totalorder %s8, 1
        %s107 = scalar_select %p106, %s8, 1
        %s108 = smul.addr %s107, 8
        %s109 = scalar_lea.vmem %s0, %s108
      $region24: #{tpu_custom_call.1} parent=19 // pred_fallthru
        _
    $region20: #{tpu_custom_call.1} parent=5 // pred_fallthru
      _
    %p110 = scmp.le.s32.totalorder 1, %s8
    %p111 = scmp.lt.s32.totalorder %s8, 3
    %p112 = pnand %p110, %p111
    %p113 = pneg %p112
    // Predicated region
    $region25: #{tpu_custom_call.1} parent=5 // pred_check
      _
    $region26: #{tpu_custom_call.1} parent=5 // pred_check_branch
      %115 = sbr.rel (%p112) target = $region28
    $region27: #{tpu_custom_call.1} parent=5 // pred_region
      %s116 = ssub.s32 %s8, 1
      %p117 = scmp.lt.s32.totalorder %s13, 1
      %s118 = scalar_select %p117, %s13, 1
      %s119 = smul.addr %s118, 8
      %s120 = scalar_lea.vmem %s0, %s119
      %p121 = pneg %p34
      %p122 = pneg %p31
      %p123 = pneg %p55
      %p124 = pneg %p52
      %p125 = pneg %p81
      %p126 = pneg %p78
      %p127 = scmp.lt.s32.totalorder %s13, 1
      %s128 = scalar_select %p127, %s13, 1
      %s129 = smul.addr %s128, 16
      %s130 = scalar_lea.vmem %s2, %s129
      %p131 = scmp.lt.s32.totalorder %s13, 1
      %s132 = scalar_select %p131, %s13, 1
      %s133 = smul.addr %s132, 8
      %s134 = scalar_lea.vmem %s0, %s133
      %p135 = scmp.lt.s32.totalorder %s13, 1
      %s136 = scalar_select %p135, %s13, 1
      %s137 = smul.addr %s136, 16
      %s138 = scalar_lea.vmem %s2, %s137
      %v139 = vld [vmem:[%s134] sm:$0x1]
      %v140 = vld [vmem:[%s134 + $0x1] sm:$0x1]
      %v141 = vld [vmem:[%s134 + $0x2] sm:$0x1]
      %v142 = vld [vmem:[%s134 + $0x3] sm:$0x1]
      %v143 = vld [vmem:[%s134 + $0x4] sm:$0x1]
      %v144 = vld [vmem:[%s134 + $0x5] sm:$0x1]
      %v145 = vld [vmem:[%s134 + $0x6] sm:$0x1]
      %v146 = vld [vmem:[%s134 + $0x7] sm:$0x1]
      %155 = vst [vmem:[#allocation1] ss:$9 sm:$0xff] %v139
      %s156 = scalar_lea.vmem [#allocation1], 1
      %157 = vst [vmem:[%s156] ss:$9 sm:$0xff] %v140
      %s158 = scalar_lea.vmem [#allocation1], 2
      %159 = vst [vmem:[%s158] ss:$9 sm:$0xff] %v141
      %s160 = scalar_lea.vmem [#allocation1], 3
      %161 = vst [vmem:[%s160] ss:$9 sm:$0xff] %v142
      %s162 = scalar_lea.vmem [#allocation1], 4
      %163 = vst [vmem:[%s162] ss:$9 sm:$0xff] %v143
      %s164 = scalar_lea.vmem [#allocation1], 5
      %165 = vst [vmem:[%s164] ss:$9 sm:$0xff] %v144
      %s166 = scalar_lea.vmem [#allocation1], 6
      %167 = vst [vmem:[%s166] ss:$9 sm:$0xff] %v145
      %s168 = scalar_lea.vmem [#allocation1], 7
      %169 = vst [vmem:[%s168] ss:$9 sm:$0xff] %v146
      %v170 = vld [vmem:[#allocation1] sm:$0xff]
      %172 = vxpose.xlu0.b32.start [1/16] %v170, 128
      %173 = vxpose.xlu0.b32.cont [2/16] 0.0, 128
      %174 = vxpose.xlu0.b32.cont [3/16] 0.0, 128
      %175 = vxpose.xlu0.b32.cont [4/16] 0.0, 128
      %176 = vxpose.xlu0.b32.cont [5/16] 0.0, 128
      %177 = vxpose.xlu0.b32.cont [6/16] 0.0, 128
      %178 = vxpose.xlu0.b32.cont [7/16] 0.0, 128
      %179 = vxpose.xlu0.b32.cont [8/16] 0.0, 128
      %180 = vxpose.xlu0.b32.cont [9/16] 0.0, 128
      %181 = vxpose.xlu0.b32.cont [10/16] 0.0, 128
      %182 = vxpose.xlu0.b32.cont [11/16] 0.0, 128
      %183 = vxpose.xlu0.b32.cont [12/16] 0.0, 128
      %184 = vxpose.xlu0.b32.cont [13/16] 0.0, 128
      %185 = vxpose.xlu0.b32.cont [14/16] 0.0, 128
      %186 = vxpose.xlu0.b32.cont [15/16] 0.0, 128
      %187 = vxpose.xlu0.b32.end [16/16] 0.0, 128
      %v188 = vpop.trf.xlu0
      %v189 = vpop.trf.xlu0
      %v190 = vpop.trf.xlu0
      %v191 = vpop.trf.xlu0
      %v192 = vpop.trf.xlu0
      %v193 = vpop.trf.xlu0
      %v194 = vpop.trf.xlu0
      %v195 = vpop.trf.xlu0
      %v196 = vpop.trf.xlu0
      %v197 = vpop.trf.xlu0
      %v198 = vpop.trf.xlu0
      %v199 = vpop.trf.xlu0
      %v200 = vpop.trf.xlu0
      %v201 = vpop.trf.xlu0
      %v202 = vpop.trf.xlu0
      %v203 = vpop.trf.xlu0
      %v204 = vld [vmem:[%s1 + $0x27] sm:$0x3]
      %vm205 = vcmask 64512
      %v206 = vsel %vm205, %v188, 0.0
      %v207 = vsel %vm205, %v189, 0.0
      %v208 = vadd.f32 %v206, %v207
      %209 = vadd.xlane.f32.xlu0 %v208
      %v210 = vpop.xlane.xlu0 %209
      %v211 = vrot.slane %v210, 4
      %v212 = vadd.f32 %v210, %v211
      %v213 = vrot.slane %v212, 2
      %v214 = vadd.f32 %v212, %v213
      %v215 = vrot.slane %v214, 1
      %v216 = vadd.f32 %v214, %v215
      %s217 = vtos %v216
      %v218 = vmul.f32 %v188, %v188
      %v219 = vmul.f32 %v189, %v189
      %v220 = vsel %vm205, %v218, 0.0
      %v221 = vsel %vm205, %v219, 0.0
      %v222 = vadd.f32 %v220, %v221
      %223 = vadd.xlane.f32.xlu0 %v222
      %v224 = vpop.xlane.xlu0 %223
      %v225 = vrot.slane %v224, 4
      %v226 = vadd.f32 %v224, %v225
      %v227 = vrot.slane %v226, 2
      %v228 = vadd.f32 %v226, %v227
      %v229 = vrot.slane %v228, 1
      %v230 = vadd.f32 %v228, %v229
      %s231 = vtos %v230
      %s232 = smul.f32 %s217, 0.0078125
      %s233 = smul.f32 %s231, 0.0078125
      %s234 = smul.f32 %s232, %s232
      %s235 = ssub.f32 %s233, %s234
      %s236 = smax.f32 %s235, 0.0
      %v237 = vstv %s232
      %v238 = vsub.f32 %v188, %v237
      %v239 = vsub.f32 %v189, %v237
      %s240 = sadd.f32 %s236, 1e-05
      %v241 = vstv %s240
      %v242 = vrsqrt.pop %v241
      %v243 = vmul.f32 %v242, %v241
      %v244 = vmul.f32 %v243, %v242
      %v245 = vmul.f32 0.5, %v244
      %v246 = vsub.f32 1.5, %v245
      %v247 = vmul.f32 %v242, %v246
      %vm248 = vweird.f32 %v241
      %vm249 = vweird.f32 %v242
      %vm250 = vmor %vm248, %vm249
      %v251 = vsel %vm250, %v242, %v247
      %s252 = vtos %v251
      %v253 = vstv %s252
      %v254 = vmul.f32 %v238, %v253
      %v255 = vmul.f32 %v239, %v253
      %v256 = vperm.slane %v204, 0
      %v257 = vmul.f32 %v254, %v256
      %v258 = vmul.f32 %v255, %v256
      %v259 = vperm.slane %v204, 1
      %v260 = vadd.f32 %v257, %v259
      %v261 = vadd.f32 %v258, %v259
      %vm264 = vcmask 1046528
      %v265 = vrot.slane %v260, 1
      %v266 = vrot.slane %v261, 1
      %v267 = vsel %vm264, %v265, %v266
      %v270 = vsel %vm264, %v266, 0.0
      %v271 = vadd.f32 %v260, %v267
      %v272 = vadd.f32 %v261, %v270
      %v273 = vmul.f32 %v271, 0.5
      %v274 = vmul.f32 %v272, 0.5
      %275 = vst.msk [vmem:[#allocation2] sm:$0xff] %vm205, %v273
      %276 = vst.msk [vmem:[#allocation2 + $0x8] sm:$0xff] %vm205, %v274
      %v277 = vld [vmem:[#allocation2] ss:$2 sm:$0xff]
      %v278 = vld [vmem:[%s1 + $0x1f] sm:$0xff]
      %v280 = vsel %vm205, %v277, 0
      %282 = vmatpush.msra.mxu0 0.0
      %283 = vmatpush.msra.mxu0 0.0
      %284 = vmatpush.msra.mxu0 0.0
      %285 = vmatpush.msra.mxu0 0.0
      %286 = vmatpush.msra.mxu0 0.0
      %287 = vmatpush.msra.mxu0 0.0
      %288 = vmatpush.msra.mxu0 0.0
      %289 = vmatpush.msra.mxu0 0.0
      %290 = vmatpush.msra.mxu0 0.0
      %291 = vmatpush.msra.mxu0 0.0
      %292 = vmatpush.msra.mxu0 0.0
      %293 = vmatpush.msra.mxu0 0.0
      %294 = vmatpush.msra.mxu0 0.0
      %295 = vmatpush.msra.mxu0 0.0
      %296 = vmatpush.msra.mxu0 0.0
      %297 = vmatpush.msra.mxu0 %v278
      %298 = vmatmul.f32.gmra.mxu0 %v280
      %v299 = vpop.f32.mrf.mxu0
      %v300 = vadd.f32 0.0, %v299
      %301 = vdwg.mxu0
      %v302 = vld [vmem:[%s1] sm:$0xff]
      %v303 = vld [vmem:[%s1 + $0x8] sm:$0x3]
      %v305 = vsel %vm205, %v188, 0
      %v308 = vsel %vm205, %v189, 0
      %310 = vmatpush.msra.mxu0 0.0
      %311 = vmatpush.msra.mxu0 0.0
      %312 = vmatpush.msra.mxu0 0.0
      %313 = vmatpush.msra.mxu0 0.0
      %314 = vmatpush.msra.mxu0 0.0
      %315 = vmatpush.msra.mxu0 0.0
      %316 = vmatpush.msra.mxu0 0.0
      %317 = vmatpush.msra.mxu0 0.0
      %318 = vmatpush.msra.mxu0 0.0
      %319 = vmatpush.msra.mxu0 0.0
      %320 = vmatpush.msra.mxu0 0.0
      %321 = vmatpush.msra.mxu0 0.0
      %322 = vmatpush.msra.mxu0 0.0
      %323 = vmatpush.msra.mxu0 0.0
      %324 = vmatpush.msra.mxu0 0.0
      %325 = vmatpush.msra.mxu0 %v302
      %326 = vmatmul.f32.gmra.mxu0 %v305
      %v327 = vpop.f32.mrf.mxu0
      %v328 = vadd.f32 0.0, %v327
      %329 = vmatmul.f32.gmra.mxu0 %v308
      %v330 = vpop.f32.mrf.mxu0
      %v331 = vadd.f32 0.0, %v330
      %332 = vdwg.mxu0
      %vm333 = vcmask 31744
      %v334 = vsel %vm333, %v328, 0.0
      %v335 = vsel %vm333, %v331, 0.0
      %v336 = vadd.f32 %v334, %v335
      %337 = vadd.xlane.f32.xlu0 %v336
      %v338 = vpop.xlane.xlu0 %337
      %v339 = vrot.slane %v338, 4
      %v340 = vadd.f32 %v338, %v339
      %v341 = vrot.slane %v340, 2
      %v342 = vadd.f32 %v340, %v341
      %v343 = vrot.slane %v342, 1
      %v344 = vadd.f32 %v342, %v343
      %s345 = vtos %v344
      %v346 = vmul.f32 %v328, %v328
      %v347 = vmul.f32 %v331, %v331
      %v348 = vsel %vm333, %v346, 0.0
      %v349 = vsel %vm333, %v347, 0.0
      %v350 = vadd.f32 %v348, %v349
      %351 = vadd.xlane.f32.xlu0 %v350
      %v352 = vpop.xlane.xlu0 %351
      %v353 = vrot.slane %v352, 4
      %v354 = vadd.f32 %v352, %v353
      %v355 = vrot.slane %v354, 2
      %v356 = vadd.f32 %v354, %v355
      %v357 = vrot.slane %v356, 1
      %v358 = vadd.f32 %v356, %v357
      %s359 = vtos %v358
      %s360 = smul.f32 %s345, 0.015625
      %s361 = smul.f32 %s359, 0.015625
      %s362 = smul.f32 %s360, %s360
      %s363 = ssub.f32 %s361, %s362
      %s364 = smax.f32 %s363, 0.0
      %v365 = vstv %s360
      %v366 = vsub.f32 %v328, %v365
      %v367 = vsub.f32 %v331, %v365
      %s368 = sadd.f32 %s364, 1e-05
      %v369 = vstv %s368
      %v370 = vrsqrt.pop %v369
      %v371 = vmul.f32 %v370, %v369
      %v372 = vmul.f32 %v371, %v370
      %v373 = vmul.f32 0.5, %v372
      %v374 = vsub.f32 1.5, %v373
      %v375 = vmul.f32 %v370, %v374
      %vm376 = vweird.f32 %v369
      %vm377 = vweird.f32 %v370
      %vm378 = vmor %vm376, %vm377
      %v379 = vsel %vm378, %v370, %v375
      %s380 = vtos %v379
      %v381 = vstv %s380
      %v382 = vmul.f32 %v366, %v381
      %v383 = vmul.f32 %v367, %v381
      %v384 = vperm.slane %v303, 0
      %v385 = vmul.f32 %v382, %v384
      %v386 = vmul.f32 %v383, %v384
      %v387 = vperm.slane %v303, 1
      %v388 = vadd.f32 %v385, %v387
      %v389 = vadd.f32 %v386, %v387
      %v390 = vmax.f32 %v388, 0.0
      %v391 = vmax.f32 %v389, 0.0
      %vm394 = vcmask 1040384
      %v395 = vrot.slane %v390, 7
      %v396 = vrot.slane %v391, 7
      %v397 = vsel %vm394, %v395, %v396
      %v400 = vsel %vm394, 0.0, %v395
      %v401 = vsel %vm394, %v396, 0.0
      %v402 = vld [vmem:[%s1 + $0xa] sm:$0xf]
      %v403 = vld [vmem:[%s1 + $0xe] sm:$0xf]
      %v406 = vrot.slane %v400, 1
      %v407 = vrot.slane %v397, 1
      %v408 = vsel %vm264, %v406, %v407
      %v409 = vrot.slane %v401, 1
      %v410 = vsel %vm264, %v407, %v409
      %v411 = vsel %vm333, %v408, 0
      %v413 = vsel %vm333, %v410, 0
      %vm415 = vcmask 1043456
      %v417 = vsel %vm415, %v403, 0
      %419 = vmatpush.msra.mxu0 0.0
      %420 = vmatpush.msra.mxu0 0.0
      %421 = vmatpush.msra.mxu0 0.0
      %422 = vmatpush.msra.mxu0 0.0
      %423 = vmatpush.msra.mxu0 0.0
      %424 = vmatpush.msra.mxu0 0.0
      %425 = vmatpush.msra.mxu0 0.0
      %426 = vmatpush.msra.mxu0 0.0
      %427 = vmatpush.msra.mxu0 0.0
      %428 = vmatpush.msra.mxu0 0.0
      %429 = vmatpush.msra.mxu0 0.0
      %430 = vmatpush.msra.mxu0 0.0
      %431 = vmatpush.msra.mxu0 0.0
      %432 = vmatpush.msra.mxu0 0.0
      %433 = vmatpush.msra.mxu0 0.0
      %434 = vmatpush.msra.mxu0 %v417
      %435 = vmatmul.f32.gmra.mxu0 %v411
      %v436 = vpop.f32.mrf.mxu0
      %v437 = vadd.f32 0.0, %v436
      %438 = vmatmul.f32.gmra.mxu0 %v413
      %v439 = vpop.f32.mrf.mxu0
      %v440 = vadd.f32 0.0, %v439
      %441 = vdwg.mxu0
      %v442 = vsel %vm333, %v400, 0
      %v444 = vsel %vm333, %v397, 0
      %v447 = vsel %vm415, %v402, 0
      %449 = vmatpush.msra.mxu0 0.0
      %450 = vmatpush.msra.mxu0 0.0
      %451 = vmatpush.msra.mxu0 0.0
      %452 = vmatpush.msra.mxu0 0.0
      %453 = vmatpush.msra.mxu0 0.0
      %454 = vmatpush.msra.mxu0 0.0
      %455 = vmatpush.msra.mxu0 0.0
      %456 = vmatpush.msra.mxu0 0.0
      %457 = vmatpush.msra.mxu0 0.0
      %458 = vmatpush.msra.mxu0 0.0
      %459 = vmatpush.msra.mxu0 0.0
      %460 = vmatpush.msra.mxu0 0.0
      %461 = vmatpush.msra.mxu0 0.0
      %462 = vmatpush.msra.mxu0 0.0
      %463 = vmatpush.msra.mxu0 0.0
      %464 = vmatpush.msra.mxu0 %v447
      %465 = vmatmul.f32.gmra.mxu0 %v442
      %v466 = vpop.f32.mrf.mxu0
      %v467 = vadd.f32 %v437, %v466
      %468 = vmatmul.f32.gmra.mxu0 %v444
      %v469 = vpop.f32.mrf.mxu0
      %v470 = vadd.f32 %v440, %v469
      %471 = vdwg.mxu0
      %v472 = vld [vmem:[%s1 + $0x12] sm:$0xf]
      %vm473 = vcmask 1045504
      %v474 = vrot.slane %v400, 2
      %v475 = vrot.slane %v397, 2
      %v476 = vsel %vm473, %v474, %v475
      %v477 = vrot.slane %v401, 2
      %v478 = vsel %vm473, %v475, %v477
      %v479 = vsel %vm333, %v476, 0
      %v481 = vsel %vm333, %v478, 0
      %v484 = vsel %vm415, %v472, 0
      %486 = vmatpush.msra.mxu0 0.0
      %487 = vmatpush.msra.mxu0 0.0
      %488 = vmatpush.msra.mxu0 0.0
      %489 = vmatpush.msra.mxu0 0.0
      %490 = vmatpush.msra.mxu0 0.0
      %491 = vmatpush.msra.mxu0 0.0
      %492 = vmatpush.msra.mxu0 0.0
      %493 = vmatpush.msra.mxu0 0.0
      %494 = vmatpush.msra.mxu0 0.0
      %495 = vmatpush.msra.mxu0 0.0
      %496 = vmatpush.msra.mxu0 0.0
      %497 = vmatpush.msra.mxu0 0.0
      %498 = vmatpush.msra.mxu0 0.0
      %499 = vmatpush.msra.mxu0 0.0
      %500 = vmatpush.msra.mxu0 0.0
      %501 = vmatpush.msra.mxu0 %v484
      %502 = vmatmul.f32.gmra.mxu0 %v479
      %v503 = vpop.f32.mrf.mxu0
      %v504 = vadd.f32 0.0, %v503
      %505 = vmatmul.f32.gmra.mxu0 %v481
      %v506 = vpop.f32.mrf.mxu0
      %v507 = vadd.f32 0.0, %v506
      %508 = vdwg.mxu0
      %v509 = vadd.f32 %v467, %v504
      %v510 = vadd.f32 %v470, %v507
      %v511 = vld [vmem:[%s1 + $0x16] sm:$0x7]
      %v512 = vperm.slane %v511, 2
      %v513 = vadd.f32 %v509, %v512
      %v514 = vadd.f32 %v510, %v512
      %v515 = vsel %vm333, %v513, 0.0
      %v516 = vsel %vm333, %v514, 0.0
      %v517 = vadd.f32 %v515, %v516
      %518 = vadd.xlane.f32.xlu0 %v517
      %v519 = vpop.xlane.xlu0 %518
      %v520 = vrot.slane %v519, 4
      %v521 = vadd.f32 %v519, %v520
      %v522 = vrot.slane %v521, 2
      %v523 = vadd.f32 %v521, %v522
      %v524 = vrot.slane %v523, 1
      %v525 = vadd.f32 %v523, %v524
      %s526 = vtos %v525
      %v527 = vmul.f32 %v513, %v513
      %v528 = vmul.f32 %v514, %v514
      %v529 = vsel %vm333, %v527, 0.0
      %v530 = vsel %vm333, %v528, 0.0
      %v531 = vadd.f32 %v529, %v530
      %532 = vadd.xlane.f32.xlu0 %v531
      %v533 = vpop.xlane.xlu0 %532
      %v534 = vrot.slane %v533, 4
      %v535 = vadd.f32 %v533, %v534
      %v536 = vrot.slane %v535, 2
      %v537 = vadd.f32 %v535, %v536
      %v538 = vrot.slane %v537, 1
      %v539 = vadd.f32 %v537, %v538
      %s540 = vtos %v539
      %s541 = smul.f32 %s526, 0.015625
      %s542 = smul.f32 %s540, 0.015625
      %s543 = smul.f32 %s541, %s541
      %s544 = ssub.f32 %s542, %s543
      %s545 = smax.f32 %s544, 0.0
      %v546 = vstv %s541
      %v547 = vsub.f32 %v513, %v546
      %v548 = vsub.f32 %v514, %v546
      %s549 = sadd.f32 %s545, 1e-05
      %v550 = vstv %s549
      %v551 = vrsqrt.pop %v550
      %v552 = vmul.f32 %v551, %v550
      %v553 = vmul.f32 %v552, %v551
      %v554 = vmul.f32 0.5, %v553
      %v555 = vsub.f32 1.5, %v554
      %v556 = vmul.f32 %v551, %v555
      %vm557 = vweird.f32 %v550
      %vm558 = vweird.f32 %v551
      %vm559 = vmor %vm557, %vm558
      %v560 = vsel %vm559, %v551, %v556
      %s561 = vtos %v560
      %v562 = vstv %s561
      %v563 = vmul.f32 %v547, %v562
      %v564 = vmul.f32 %v548, %v562
      %v565 = vperm.slane %v511, 0
      %v566 = vmul.f32 %v563, %v565
      %v567 = vmul.f32 %v564, %v565
      %v568 = vperm.slane %v511, 1
      %v569 = vadd.f32 %v566, %v568
      %v570 = vadd.f32 %v567, %v568
      %v571 = vmax.f32 %v569, 0.0
      %v572 = vmax.f32 %v570, 0.0
      %v575 = vrot.slane %v571, 1
      %v576 = vrot.slane %v572, 1
      %v577 = vsel %vm264, %v575, %v576
      %v580 = vsel %vm264, %v576, 0.0
      %v581 = vadd.f32 %v571, %v577
      %v582 = vadd.f32 %v572, %v580
      %v583 = vmul.f32 %v581, 0.5
      %v584 = vmul.f32 %v582, 0.5
      %585 = vst.msk [vmem:[#allocation2] sm:$0xff] %vm333, %v583
      %586 = vst.msk [vmem:[#allocation2 + $0x8] sm:$0xff] %vm333, %v584
      %v587 = vld [vmem:[#allocation2] ss:$2 sm:$0xff]
      %v588 = vld [vmem:[%s1 + $0x1d] sm:$0x3]
      %v589 = vld [vmem:[%s1 + $0x19] sm:$0xf]
      %v591 = vsel %vm333, %v587, 0
      %v594 = vsel %vm415, %v589, 0
      %596 = vmatpush.msra.mxu0 0.0
      %597 = vmatpush.msra.mxu0 0.0
      %598 = vmatpush.msra.mxu0 0.0
      %599 = vmatpush.msra.mxu0 0.0
      %600 = vmatpush.msra.mxu0 0.0
      %601 = vmatpush.msra.mxu0 0.0
      %602 = vmatpush.msra.mxu0 0.0
      %603 = vmatpush.msra.mxu0 0.0
      %604 = vmatpush.msra.mxu0 0.0
      %605 = vmatpush.msra.mxu0 0.0
      %606 = vmatpush.msra.mxu0 0.0
      %607 = vmatpush.msra.mxu0 0.0
      %608 = vmatpush.msra.mxu0 0.0
      %609 = vmatpush.msra.mxu0 0.0
      %610 = vmatpush.msra.mxu0 0.0
      %611 = vmatpush.msra.mxu0 %v594
      %612 = vmatmul.f32.gmra.mxu0 %v591
      %v613 = vpop.f32.mrf.mxu0
      %v614 = vadd.f32 0.0, %v613
      %615 = vdwg.mxu0
      %vm616 = vcmask 130048
      %v617 = vsel %vm616, %v614, 0.0
      %618 = vadd.xlane.f32.xlu0 %v617
      %v619 = vpop.xlane.xlu0 %618
      %v620 = vrot.slane %v619, 4
      %v621 = vadd.f32 %v619, %v620
      %v622 = vrot.slane %v621, 2
      %v623 = vadd.f32 %v621, %v622
      %v624 = vrot.slane %v623, 1
      %v625 = vadd.f32 %v623, %v624
      %s626 = vtos %v625
      %v627 = vmul.f32 %v614, %v614
      %v628 = vsel %vm616, %v627, 0.0
      %629 = vadd.xlane.f32.xlu0 %v628
      %v630 = vpop.xlane.xlu0 %629
      %v631 = vrot.slane %v630, 4
      %v632 = vadd.f32 %v630, %v631
      %v633 = vrot.slane %v632, 2
      %v634 = vadd.f32 %v632, %v633
      %v635 = vrot.slane %v634, 1
      %v636 = vadd.f32 %v634, %v635
      %s637 = vtos %v636
      %s638 = smul.f32 %s626, 0.0078125
      %s639 = smul.f32 %s637, 0.0078125
      %s640 = smul.f32 %s638, %s638
      %s641 = ssub.f32 %s639, %s640
      %s642 = smax.f32 %s641, 0.0
      %v643 = vstv %s638
      %v644 = vsub.f32 %v614, %v643
      %s645 = sadd.f32 %s642, 1e-05
      %v646 = vstv %s645
      %v647 = vrsqrt.pop %v646
      %v648 = vmul.f32 %v647, %v646
      %v649 = vmul.f32 %v648, %v647
      %v650 = vmul.f32 0.5, %v649
      %v651 = vsub.f32 1.5, %v650
      %v652 = vmul.f32 %v647, %v651
      %vm653 = vweird.f32 %v646
      %vm654 = vweird.f32 %v647
      %vm655 = vmor %vm653, %vm654
      %v656 = vsel %vm655, %v647, %v652
      %s657 = vtos %v656
      %v658 = vstv %s657
      %v659 = vmul.f32 %v644, %v658
      %v660 = vperm.slane %v588, 0
      %v661 = vmul.f32 %v659, %v660
      %v662 = vperm.slane %v588, 1
      %v663 = vadd.f32 %v661, %v662
      %v664 = vmax.f32 %v663, 0.0
      %v665 = vadd.f32 %v664, %v300
      %v666 = vld [vmem:[%s1 + $0x29] sm:$0xff]
      %v667 = vld [vmem:[%s1 + $0x31] sm:$0xff]
      %v668 = vld [vmem:[%s1 + $0x39] sm:$0x3]
      %v670 = vsel %vm616, %v665, 0
      %672 = vmatpush.msra.mxu0 0.0
      %673 = vmatpush.msra.mxu0 0.0
      %674 = vmatpush.msra.mxu0 0.0
      %675 = vmatpush.msra.mxu0 0.0
      %676 = vmatpush.msra.mxu0 0.0
      %677 = vmatpush.msra.mxu0 0.0
      %678 = vmatpush.msra.mxu0 0.0
      %679 = vmatpush.msra.mxu0 0.0
      %680 = vmatpush.msra.mxu0 0.0
      %681 = vmatpush.msra.mxu0 0.0
      %682 = vmatpush.msra.mxu0 0.0
      %683 = vmatpush.msra.mxu0 0.0
      %684 = vmatpush.msra.mxu0 0.0
      %685 = vmatpush.msra.mxu0 0.0
      %686 = vmatpush.msra.mxu0 %v667
      %687 = vmatpush.msra.mxu0 %v666
      %688 = vmatmul.f32.gmra.mxu0 %v670
      %v689 = vpop.f32.mrf.mxu0
      %v690 = vadd.f32 0.0, %v689
      %691 = vdwg.mxu0
      %v692 = vsel %vm205, %v690, 0.0
      %693 = vadd.xlane.f32.xlu0 %v692
      %v694 = vpop.xlane.xlu0 %693
      %v695 = vrot.slane %v694, 4
      %v696 = vadd.f32 %v694, %v695
      %v697 = vrot.slane %v696, 2
      %v698 = vadd.f32 %v696, %v697
      %v699 = vrot.slane %v698, 1
      %v700 = vadd.f32 %v698, %v699
      %s701 = vtos %v700
      %v702 = vmul.f32 %v690, %v690
      %v703 = vsel %vm205, %v702, 0.0
      %704 = vadd.xlane.f32.xlu0 %v703
      %v705 = vpop.xlane.xlu0 %704
      %v706 = vrot.slane %v705, 4
      %v707 = vadd.f32 %v705, %v706
      %v708 = vrot.slane %v707, 2
      %v709 = vadd.f32 %v707, %v708
      %v710 = vrot.slane %v709, 1
      %v711 = vadd.f32 %v709, %v710
      %s712 = vtos %v711
      %s713 = smul.f32 %s701, 0.015625
      %s714 = smul.f32 %s712, 0.015625
      %s715 = smul.f32 %s713, %s713
      %s716 = ssub.f32 %s714, %s715
      %s717 = smax.f32 %s716, 0.0
      %v718 = vstv %s713
      %v719 = vsub.f32 %v690, %v718
      %s720 = sadd.f32 %s717, 1e-05
      %v721 = vstv %s720
      %v722 = vrsqrt.pop %v721
      %v723 = vmul.f32 %v722, %v721
      %v724 = vmul.f32 %v723, %v722
      %v725 = vmul.f32 0.5, %v724
      %v726 = vsub.f32 1.5, %v725
      %v727 = vmul.f32 %v722, %v726
      %vm728 = vweird.f32 %v721
      %vm729 = vweird.f32 %v722
      %vm730 = vmor %vm728, %vm729
      %v731 = vsel %vm730, %v722, %v727
      %s732 = vtos %v731
      %v733 = vstv %s732
      %v734 = vmul.f32 %v719, %v733
      %v735 = vperm.slane %v668, 0
      %v736 = vmul.f32 %v734, %v735
      %v737 = vperm.slane %v668, 1
      %v738 = vadd.f32 %v736, %v737
      %v739 = vmax.f32 %v738, 0.0
      %v741 = vrot.slane %v739, 7
      %v743 = vsel %vm394, 0.0, %v741
      %v744 = vsel %vm394, %v741, 0.0
      %v745 = vld [vmem:[%s1 + $0x3b] sm:$0xff]
      %v746 = vld [vmem:[%s1 + $0x43] sm:$0xff]
      %v749 = vrot.slane %v743, 1
      %v750 = vrot.slane %v744, 1
      %v751 = vsel %vm264, %v749, %v750
      %v752 = vsel %vm205, %v751, 0
      %754 = vmatpush.msra.mxu0 0.0
      %755 = vmatpush.msra.mxu0 0.0
      %756 = vmatpush.msra.mxu0 0.0
      %757 = vmatpush.msra.mxu0 0.0
      %758 = vmatpush.msra.mxu0 0.0
      %759 = vmatpush.msra.mxu0 0.0
      %760 = vmatpush.msra.mxu0 0.0
      %761 = vmatpush.msra.mxu0 0.0
      %762 = vmatpush.msra.mxu0 0.0
      %763 = vmatpush.msra.mxu0 0.0
      %764 = vmatpush.msra.mxu0 0.0
      %765 = vmatpush.msra.mxu0 0.0
      %766 = vmatpush.msra.mxu0 0.0
      %767 = vmatpush.msra.mxu0 0.0
      %768 = vmatpush.msra.mxu0 0.0
      %769 = vmatpush.msra.mxu0 %v746
      %770 = vmatmul.f32.gmra.mxu0 %v752
      %v771 = vpop.f32.mrf.mxu0
      %v772 = vadd.f32 0.0, %v771
      %773 = vdwg.mxu0
      %v774 = vsel %vm205, %v743, 0
      %776 = vmatpush.msra.mxu0 0.0
      %777 = vmatpush.msra.mxu0 0.0
      %778 = vmatpush.msra.mxu0 0.0
      %779 = vmatpush.msra.mxu0 0.0
      %780 = vmatpush.msra.mxu0 0.0
      %781 = vmatpush.msra.mxu0 0.0
      %782 = vmatpush.msra.mxu0 0.0
      %783 = vmatpush.msra.mxu0 0.0
      %784 = vmatpush.msra.mxu0 0.0
      %785 = vmatpush.msra.mxu0 0.0
      %786 = vmatpush.msra.mxu0 0.0
      %787 = vmatpush.msra.mxu0 0.0
      %788 = vmatpush.msra.mxu0 0.0
      %789 = vmatpush.msra.mxu0 0.0
      %790 = vmatpush.msra.mxu0 0.0
      %791 = vmatpush.msra.mxu0 %v745
      %792 = vmatmul.f32.gmra.mxu0 %v774
      %v793 = vpop.f32.mrf.mxu0
      %v794 = vadd.f32 %v772, %v793
      %795 = vdwg.mxu0
      %v796 = vld [vmem:[%s1 + $0x4b] sm:$0xff]
      %v797 = vrot.slane %v743, 2
      %v798 = vrot.slane %v744, 2
      %v799 = vsel %vm473, %v797, %v798
      %v800 = vsel %vm205, %v799, 0
      %802 = vmatpush.msra.mxu0 0.0
      %803 = vmatpush.msra.mxu0 0.0
      %804 = vmatpush.msra.mxu0 0.0
      %805 = vmatpush.msra.mxu0 0.0
      %806 = vmatpush.msra.mxu0 0.0
      %807 = vmatpush.msra.mxu0 0.0
      %808 = vmatpush.msra.mxu0 0.0
      %809 = vmatpush.msra.mxu0 0.0
      %810 = vmatpush.msra.mxu0 0.0
      %811 = vmatpush.msra.mxu0 0.0
      %812 = vmatpush.msra.mxu0 0.0
      %813 = vmatpush.msra.mxu0 0.0
      %814 = vmatpush.msra.mxu0 0.0
      %815 = vmatpush.msra.mxu0 0.0
      %816 = vmatpush.msra.mxu0 0.0
      %817 = vmatpush.msra.mxu0 %v796
      %818 = vmatmul.f32.gmra.mxu0 %v800
      %v819 = vpop.f32.mrf.mxu0
      %v820 = vadd.f32 0.0, %v819
      %821 = vdwg.mxu0
      %v822 = vadd.f32 %v794, %v820
      %v823 = vld [vmem:[%s1 + $0x53] sm:$0x7]
      %v824 = vperm.slane %v823, 2
      %v825 = vadd.f32 %v822, %v824
      %v826 = vsel %vm205, %v825, 0.0
      %827 = vadd.xlane.f32.xlu0 %v826
      %v828 = vpop.xlane.xlu0 %827
      %v829 = vrot.slane %v828, 4
      %v830 = vadd.f32 %v828, %v829
      %v831 = vrot.slane %v830, 2
      %v832 = vadd.f32 %v830, %v831
      %v833 = vrot.slane %v832, 1
      %v834 = vadd.f32 %v832, %v833
      %s835 = vtos %v834
      %v836 = vmul.f32 %v825, %v825
      %v837 = vsel %vm205, %v836, 0.0
      %838 = vadd.xlane.f32.xlu0 %v837
      %v839 = vpop.xlane.xlu0 %838
      %v840 = vrot.slane %v839, 4
      %v841 = vadd.f32 %v839, %v840
      %v842 = vrot.slane %v841, 2
      %v843 = vadd.f32 %v841, %v842
      %v844 = vrot.slane %v843, 1
      %v845 = vadd.f32 %v843, %v844
      %s846 = vtos %v845
      %s847 = smul.f32 %s835, 0.015625
      %s848 = smul.f32 %s846, 0.015625
      %s849 = smul.f32 %s847, %s847
      %s850 = ssub.f32 %s848, %s849
      %s851 = smax.f32 %s850, 0.0
      %v852 = vstv %s847
      %v853 = vsub.f32 %v825, %v852
      %s854 = sadd.f32 %s851, 1e-05
      %v855 = vstv %s854
      %v856 = vrsqrt.pop %v855
      %v857 = vmul.f32 %v856, %v855
      %v858 = vmul.f32 %v857, %v856
      %v859 = vmul.f32 0.5, %v858
      %v860 = vsub.f32 1.5, %v859
      %v861 = vmul.f32 %v856, %v860
      %vm862 = vweird.f32 %v855
      %vm863 = vweird.f32 %v856
      %vm864 = vmor %vm862, %vm863
      %v865 = vsel %vm864, %v856, %v861
      %s866 = vtos %v865
      %v867 = vstv %s866
      %v868 = vmul.f32 %v853, %v867
      %v869 = vperm.slane %v823, 0
      %v870 = vmul.f32 %v868, %v869
      %v871 = vperm.slane %v823, 1
      %v872 = vadd.f32 %v870, %v871
      %v873 = vmax.f32 %v872, 0.0
      %v874 = vld [vmem:[%s1 + $0x5e] sm:$0x3]
      %v875 = vld [vmem:[%s1 + $0x56] sm:$0xff]
      %v877 = vsel %vm205, %v873, 0
      %879 = vmatpush.msra.mxu0 0.0
      %880 = vmatpush.msra.mxu0 0.0
      %881 = vmatpush.msra.mxu0 0.0
      %882 = vmatpush.msra.mxu0 0.0
      %883 = vmatpush.msra.mxu0 0.0
      %884 = vmatpush.msra.mxu0 0.0
      %885 = vmatpush.msra.mxu0 0.0
      %886 = vmatpush.msra.mxu0 0.0
      %887 = vmatpush.msra.mxu0 0.0
      %888 = vmatpush.msra.mxu0 0.0
      %889 = vmatpush.msra.mxu0 0.0
      %890 = vmatpush.msra.mxu0 0.0
      %891 = vmatpush.msra.mxu0 0.0
      %892 = vmatpush.msra.mxu0 0.0
      %893 = vmatpush.msra.mxu0 0.0
      %894 = vmatpush.msra.mxu0 %v875
      %895 = vmatmul.f32.gmra.mxu0 %v877
      %v896 = vpop.f32.mrf.mxu0
      %v897 = vadd.f32 0.0, %v896
      %898 = vdwg.mxu0
      %v899 = vsel %vm616, %v897, 0.0
      %900 = vadd.xlane.f32.xlu0 %v899
      %v901 = vpop.xlane.xlu0 %900
      %v902 = vrot.slane %v901, 4
      %v903 = vadd.f32 %v901, %v902
      %v904 = vrot.slane %v903, 2
      %v905 = vadd.f32 %v903, %v904
      %v906 = vrot.slane %v905, 1
      %v907 = vadd.f32 %v905, %v906
      %s908 = vtos %v907
      %v909 = vmul.f32 %v897, %v897
      %v910 = vsel %vm616, %v909, 0.0
      %911 = vadd.xlane.f32.xlu0 %v910
      %v912 = vpop.xlane.xlu0 %911
      %v913 = vrot.slane %v912, 4
      %v914 = vadd.f32 %v912, %v913
      %v915 = vrot.slane %v914, 2
      %v916 = vadd.f32 %v914, %v915
      %v917 = vrot.slane %v916, 1
      %v918 = vadd.f32 %v916, %v917
      %s919 = vtos %v918
      %s920 = smul.f32 %s908, 0.0078125
      %s921 = smul.f32 %s919, 0.0078125
      %s922 = smul.f32 %s920, %s920
      %s923 = ssub.f32 %s921, %s922
      %s924 = smax.f32 %s923, 0.0
      %v925 = vstv %s920
      %v926 = vsub.f32 %v897, %v925
      %s927 = sadd.f32 %s924, 1e-05
      %v928 = vstv %s927
      %v929 = vrsqrt.pop %v928
      %v930 = vmul.f32 %v929, %v928
      %v931 = vmul.f32 %v930, %v929
      %v932 = vmul.f32 0.5, %v931
      %v933 = vsub.f32 1.5, %v932
      %v934 = vmul.f32 %v929, %v933
      %vm935 = vweird.f32 %v928
      %vm936 = vweird.f32 %v929
      %vm937 = vmor %vm935, %vm936
      %v938 = vsel %vm937, %v929, %v934
      %s939 = vtos %v938
      %v940 = vstv %s939
      %v941 = vmul.f32 %v926, %v940
      %v942 = vperm.slane %v874, 0
      %v943 = vmul.f32 %v941, %v942
      %v944 = vperm.slane %v874, 1
      %v945 = vadd.f32 %v943, %v944
      %v946 = vmax.f32 %v945, 0.0
      %v947 = vadd.f32 %v946, %v665
      %948 = vxpose.xlu0.b32.start [1/16] %v947, 128
      %949 = vxpose.xlu0.b32.cont [2/16] 0.0, 128
      %950 = vxpose.xlu0.b32.cont [3/16] 0.0, 128
      %951 = vxpose.xlu0.b32.cont [4/16] 0.0, 128
      %952 = vxpose.xlu0.b32.cont [5/16] 0.0, 128
      %953 = vxpose.xlu0.b32.cont [6/16] 0.0, 128
      %954 = vxpose.xlu0.b32.cont [7/16] 0.0, 128
      %955 = vxpose.xlu0.b32.cont [8/16] 0.0, 128
      %956 = vxpose.xlu0.b32.cont [9/16] 0.0, 128
      %957 = vxpose.xlu0.b32.cont [10/16] 0.0, 128
      %958 = vxpose.xlu0.b32.cont [11/16] 0.0, 128
      %959 = vxpose.xlu0.b32.cont [12/16] 0.0, 128
      %960 = vxpose.xlu0.b32.cont [13/16] 0.0, 128
      %961 = vxpose.xlu0.b32.cont [14/16] 0.0, 128
      %962 = vxpose.xlu0.b32.cont [15/16] 0.0, 128
      %963 = vxpose.xlu0.b32.end [16/16] 0.0, 128
      %v964 = vpop.trf.xlu0
      %v965 = vpop.trf.xlu0
      %v966 = vpop.trf.xlu0
      %v967 = vpop.trf.xlu0
      %v968 = vpop.trf.xlu0
      %v969 = vpop.trf.xlu0
      %v970 = vpop.trf.xlu0
      %v971 = vpop.trf.xlu0
      %v972 = vpop.trf.xlu0
      %v973 = vpop.trf.xlu0
      %v974 = vpop.trf.xlu0
      %v975 = vpop.trf.xlu0
      %v976 = vpop.trf.xlu0
      %v977 = vpop.trf.xlu0
      %v978 = vpop.trf.xlu0
      %v979 = vpop.trf.xlu0
      %v982 = vrot.slane %v964, 1
      %v983 = vrot.slane %v964, 2
      %v984 = vrot.slane %v964, 3
      %v985 = vrot.slane %v964, 4
      %v986 = vrot.slane %v964, 5
      %v987 = vrot.slane %v964, 6
      %v988 = vrot.slane %v964, 7
      %v989 = vrot.slane %v965, 1
      %v990 = vrot.slane %v965, 2
      %v991 = vrot.slane %v965, 3
      %v992 = vrot.slane %v965, 4
      %v993 = vrot.slane %v965, 5
      %v994 = vrot.slane %v965, 6
      %v995 = vrot.slane %v965, 7
      %vm1010 = vcmask 57344
      %1011 = vst.msk [vmem:[%s138] sm:$0x1] %vm1010, %v964
      %1012 = vst.msk [vmem:[%s138 + $0x1] sm:$0x1] %vm1010, %v982
      %1013 = vst.msk [vmem:[%s138 + $0x2] sm:$0x1] %vm1010, %v983
      %1014 = vst.msk [vmem:[%s138 + $0x3] sm:$0x1] %vm1010, %v984
      %1015 = vst.msk [vmem:[%s138 + $0x4] sm:$0x1] %vm1010, %v985
      %1016 = vst.msk [vmem:[%s138 + $0x5] sm:$0x1] %vm1010, %v986
      %1017 = vst.msk [vmem:[%s138 + $0x6] sm:$0x1] %vm1010, %v987
      %1018 = vst.msk [vmem:[%s138 + $0x7] sm:$0x1] %vm1010, %v988
      %1019 = vst.msk [vmem:[%s138 + $0x8] sm:$0x1] %vm1010, %v965
      %1020 = vst.msk [vmem:[%s138 + $0x9] sm:$0x1] %vm1010, %v989
      %1021 = vst.msk [vmem:[%s138 + $0xa] sm:$0x1] %vm1010, %v990
      %1022 = vst.msk [vmem:[%s138 + $0xb] sm:$0x1] %vm1010, %v991
      %1023 = vst.msk [vmem:[%s138 + $0xc] sm:$0x1] %vm1010, %v992
      %1024 = vst.msk [vmem:[%s138 + $0xd] sm:$0x1] %vm1010, %v993
      %1025 = vst.msk [vmem:[%s138 + $0xe] sm:$0x1] %vm1010, %v994
      %1026 = vst.msk [vmem:[%s138 + $0xf] sm:$0x1] %vm1010, %v995
      %p1027 = scmp.lt.s32.totalorder %s13, 1
      %s1028 = scalar_select %p1027, %s13, 1
      %s1029 = smul.addr %s1028, 16
      %s1030 = scalar_lea.vmem %s2, %s1029
      // Predicated region
      $region29: #{tpu_custom_call.1} parent=27 // pred_check
        %p1031 = pneg %p78
      $region30: #{tpu_custom_call.1} parent=27 // pred_check_branch
        %1033 = sbr.rel (%p1031) target = $region32
      $region31: #{tpu_custom_call.1} parent=27 // pred_region
        _
      $region32: #{tpu_custom_call.1} parent=27 // pred_fallthru
        _
    $region28: #{tpu_custom_call.1} parent=5 // pred_fallthru
      _
    %p1034 = scmp.le.s32.totalorder 2, %s8
    // Predicated region
    $region33: #{tpu_custom_call.1} parent=5 // pred_check
      %p1035 = pneg %p1034
    $region34: #{tpu_custom_call.1} parent=5 // pred_check_branch
      %1037 = sbr.rel (%p1035) target = $region36
    $region35: #{tpu_custom_call.1} parent=5 // pred_region
      %s1038 = ssub.s32 %s8, 2
      // Predicated region
      $region37: #{tpu_custom_call.1} parent=35 // pred_check
        %p1039 = pneg %p84
      $region38: #{tpu_custom_call.1} parent=35 // pred_check_branch
        %1041 = sbr.rel (%p1039) target = $region40
      $region39: #{tpu_custom_call.1} parent=35 // pred_region
        %p1042 = scmp.lt.s32.totalorder %s14, 1
        %s1043 = scalar_select %p1042, %s14, 1
        %s1044 = smul.addr %s1043, 16
        %s1045 = scalar_lea.vmem %s2, %s1044
      $region40: #{tpu_custom_call.1} parent=35 // pred_fallthru
        _
    $region36: #{tpu_custom_call.1} parent=5 // pred_fallthru
      _
  $region6: #{tpu_custom_call.1} parent=0 // loop_footer
    %s12 = sadd.s32 1, %s8
  $region7: #{tpu_custom_call.1} parent=0 // loop_footer_branch
    %7 = sbr.rel target = $region3
  $region8: #{tpu_custom_call.1} parent=0 // loop_exit
    _

</llo_original>
